<compile_context>
chip_gen: v6e
topology: v6e:2x2x1
jax: 0.10.0
libtpu: 0.0.40
codegen_flags: <defaults>
</compile_context>

<pallas_src>
import jax
import jax.numpy as jnp
from jax.experimental import pallas as pl
from jax.experimental.pallas import tpu as pltpu


def _round_up(x, m):
    return (x + m - 1) // m * m


def _make_lstm_kernel(t_total, t_chunk, mm_dtype, unroll):
    """Builds the fused projection + recurrence + head kernel."""
    needs_mask = (t_total % t_chunk) != 0  # static: only emit masking if padded T

    def kernel(x_ref, wih_ref, whh_ref, b_ref, wout_ref, bout_ref, out_ref,
               xp_ref, h_ref, c_ref, s_ref):
        # x_ref:    (Tc, Bc, D)   time-major input chunk
        # wih_ref:  (D, 4Hp)      input weight, transposed, gate-padded
        # whh_ref:  (Hp, 4Hp)     recurrent weight, transposed, padded
        # b_ref:    (1, 4Hp)      b_ih + b_hh, gate-padded
        # wout_ref: (Hp, Op)      output Linear weight, transposed, padded
        # bout_ref: (1, Op)       output Linear bias, padded
        # out_ref:  (Bc, Op)      sigmoid(Linear(sum_t h_t)) for this batch block
        # xp_ref/h_ref/c_ref/s_ref: VMEM scratch
        t_blk = pl.program_id(1)
        n_t = pl.num_programs(1)
        Tc, Bc, D = x_ref.shape
        Hp = whh_ref.shape[0]
        G = whh_ref.shape[1]  # 4 * Hp

        # ---- init recurrent state / running sum on the first time chunk ----
        @pl.when(t_blk == 0)
        def _():
            h_ref[...] = jnp.zeros_like(h_ref)
            c_ref[...] = jnp.zeros_like(c_ref)
            s_ref[...] = jnp.zeros_like(s_ref)

        # ---- fused input projection for this chunk: one (Tc*Bc, D) GEMM ----
        # Bc is a multiple of 8, so collapsing (Tc, Bc) is a free reinterpret.
        xc = x_ref[...].reshape(Tc * Bc, D)
        xp = jnp.dot(xc.astype(mm_dtype), wih_ref[...].astype(mm_dtype),
                     preferred_element_type=jnp.float32) + b_ref[...]
        xp_ref[...] = xp.reshape(Tc, Bc, G)

        whh = whh_ref[...].astype(mm_dtype)  # resident for the whole chunk

        def step(tau, carry):
            h, c, s = carry
            gates = xp_ref[tau] + jnp.dot(h.astype(mm_dtype), whh,
                                          preferred_element_type=jnp.float32)
            # PyTorch gate order i, f, g, o. Hp is a multiple of 128, so each
            # slice is whole lane-aligned vregs (no cross-lane shuffles).
            i_g = jax.nn.sigmoid(gates[:, 0 * Hp:1 * Hp])
            f_g = jax.nn.sigmoid(gates[:, 1 * Hp:2 * Hp])
            g_g = jnp.tanh(gates[:, 2 * Hp:3 * Hp])
            o_g = jax.nn.sigmoid(gates[:, 3 * Hp:4 * Hp])
            c_raw = f_g * c + i_g * g_g
            h_raw = o_g * jnp.tanh(c_raw)
            if needs_mask:  # only present when T % Tc != 0
                valid = (t_blk * Tc + tau) < t_total
                c_new = jnp.where(valid, c_raw, c)
                h_new = jnp.where(valid, h_raw, h)
                s_new = s + jnp.where(valid, h_raw, 0.0)
            else:
                c_new, h_new, s_new = c_raw, h_raw, s + h_raw
            return h_new, c_new, s_new

        # State rides in vregs through the chunk; one VMEM load/store per chunk.
        h, c, s = jax.lax.fori_loop(
            0, Tc, step, (h_ref[...], c_ref[...], s_ref[...]), unroll=unroll)
        h_ref[...], c_ref[...], s_ref[...] = h, c, s

        # ---- output head on the last time chunk (lane-dense (Bc, Op) store) --
        @pl.when(t_blk == n_t - 1)
        def _():
            logits = (jnp.dot(s.astype(mm_dtype), wout_ref[...].astype(mm_dtype),
                              preferred_element_type=jnp.float32)
                      + bout_ref[...])
            out_ref[...] = jax.nn.sigmoid(logits)

    return kernel


def lstm_model_forward(x, w_ih, w_hh, b_ih, b_hh, w_out, b_out, *,
                       batch_block=None, time_block=None,
                       matmul_dtype=jnp.float32):
    """x: (B, T, D) float32 (batch_first, like PyTorch).
       Weights use PyTorch nn.LSTM / nn.Linear shapes:
       w_ih (4H, D), w_hh (4H, H), b_ih (4H,), b_hh (4H,), w_out (O, H), b_out (O,).
       matmul_dtype=bfloat16 casts MXU operands only (f32 accumulate & state)."""
    B, T, D = x.shape
    H = w_hh.shape[1]
    O = w_out.shape[0]
    f32 = jnp.float32

    # Lane/sublane aligned padded sizes. Zero-padded weights/biases keep the
    # padded hidden/output slots exactly zero, so padding is numerically exact.
    Hp = _round_up(H, 128)
    Op = _round_up(O, 128)
    Bc = _round_up(min(batch_block or B, 128), 8)   # batch block (sublane-aligned)
    B_pad = _round_up(B, Bc)
    Tc = time_block or min(T, 64)                   # time chunk (VMEM-bounded)
    T_pad = _round_up(T, Tc)
    G = 4 * Hp

    def pad_gate_dim(w):  # (4H, ...) -> (4Hp, ...), padding each gate block
        w4 = w.reshape((4, H) + w.shape[1:])
        pad = [(0, 0), (0, Hp - H)] + [(0, 0)] * (w.ndim - 1)
        return jnp.pad(w4, pad).reshape((4 * Hp,) + w.shape[1:])

    wih_t = pad_gate_dim(w_ih.astype(f32)).T                             # (D, 4Hp)
    whh_t = jnp.pad(pad_gate_dim(w_hh.astype(f32)), ((0, 0), (0, Hp - H))).T  # (Hp, 4Hp)
    bias = pad_gate_dim((b_ih + b_hh).astype(f32)).reshape(1, G)         # (1, 4Hp)
    wout_t = jnp.pad(w_out.astype(f32), ((0, Op - O), (0, Hp - H))).T    # (Hp, Op)
    bout = jnp.pad(b_out.astype(f32), (0, Op - O)).reshape(1, Op)        # (1, Op)

    # Time-major x, padded. x (T*B*D) is the small tensor; the big (T, B, 4H)
    # projection slab is now produced per chunk inside the kernel and never
    # touches HBM (that was a 2x HBM round-trip of the dominant tensor before).
    # TODO(synk): when matmul_dtype=bf16, stream x in bf16 to halve x traffic.
    x_tm = jnp.pad(jnp.transpose(x.astype(f32), (1, 0, 2)),
                   ((0, T_pad - T), (0, B_pad - B), (0, 0)))  # (T_pad, B_pad, D)

    # Explicit VMEM budget (v7x: 64 MiB per TensorCore).
    itemsize = 4
    vmem_bytes = (
        2 * Tc * Bc * D * itemsize                              # x chunks (2 bufs)
        + 2 * (D * G + Hp * G + G + Hp * Op + Op) * itemsize    # resident weights
        + 2 * Bc * Op * itemsize                                # output block
        + (Tc * Bc * G + 3 * Bc * Hp) * itemsize                # scratch
    )
    vmem_limit = int(min(max(2 * vmem_bytes, 32 * 1024 * 1024), 96 * 1024 * 1024))

    kernel = _make_lstm_kernel(T, Tc, matmul_dtype, unroll=min(Tc, 8))

    out_padded = pl.pallas_call(
        kernel,
        out_shape=jax.ShapeDtypeStruct((B_pad, Op), jnp.float32),
        grid_spec=pltpu.PrefetchScalarGridSpec(
            num_scalar_prefetch=0,
            grid=(B_pad // Bc, T_pad // Tc),        # (parallel batch, serial time)
            in_specs=[
                pl.BlockSpec((Tc, Bc, D), lambda b, t: (t, b, 0)),  # x chunk
                pl.BlockSpec((D, G), lambda b, t: (0, 0)),          # W_ih^T
                pl.BlockSpec((Hp, G), lambda b, t: (0, 0)),         # W_hh^T
                pl.BlockSpec((1, G), lambda b, t: (0, 0)),          # b_ih + b_hh
                pl.BlockSpec((Hp, Op), lambda b, t: (0, 0)),        # W_out^T
                pl.BlockSpec((1, Op), lambda b, t: (0, 0)),         # b_out
            ],
            out_specs=pl.BlockSpec((Bc, Op), lambda b, t: (b, 0)),
            scratch_shapes=[
                pltpu.VMEM((Tc, Bc, G), jnp.float32),  # per-chunk input projection
                pltpu.VMEM((Bc, Hp), jnp.float32),     # h
                pltpu.VMEM((Bc, Hp), jnp.float32),     # c
                pltpu.VMEM((Bc, Hp), jnp.float32),     # running sum of h_t
            ]),
        compiler_params=pltpu.CompilerParams(
            dimension_semantics=("parallel", "arbitrary"),
            vmem_limit_bytes=vmem_limit),
    )(x_tm, wih_t, whh_t, bias, wout_t, bout)

    return out_padded[:B, :O]


def lstm_model_reference(x, w_ih, w_hh, b_ih, b_hh, w_out, b_out):
    """Pure-JAX reference matching PyTorch nn.LSTM + Linear + Sigmoid."""
    B, T, D = x.shape
    H = w_hh.shape[1]
    b = b_ih + b_hh

    def step(carry, x_t):
        h, c = carry
        gates = x_t @ w_ih.T + h @ w_hh.T + b
        i = jax.nn.sigmoid(gates[:, 0 * H:1 * H])
        f = jax.nn.sigmoid(gates[:, 1 * H:2 * H])
        g = jnp.tanh(gates[:, 2 * H:3 * H])
        o = jax.nn.sigmoid(gates[:, 3 * H:4 * H])
        c = f * c + i * g
        h = o * jnp.tanh(c)
        return (h, c), h

    h0 = jnp.zeros((B, H), jnp.float32)
    c0 = jnp.zeros((B, H), jnp.float32)
    _, hs = jax.lax.scan(step, (h0, c0), jnp.transpose(x, (1, 0, 2)))
    summed = jnp.sum(hs, axis=0)
    return jax.nn.sigmoid(summed @ w_out.T + b_out)


if __name__ == "__main__":
    B, T, D, H, O = 2, 8, 16, 32, 8

    key = jax.random.PRNGKey(0)
    ks = jax.random.split(key, 8)
    scale = 1.0 / jnp.sqrt(H)

    x = jax.random.normal(ks[0], (B, T, D), jnp.float32)
    w_ih = jax.random.uniform(ks[1], (4 * H, D), jnp.float32, -scale, scale)
    w_hh = jax.random.uniform(ks[2], (4 * H, H), jnp.float32, -scale, scale)
    b_ih = jax.random.uniform(ks[3], (4 * H,), jnp.float32, -scale, scale)
    b_hh = jax.random.uniform(ks[4], (4 * H,), jnp.float32, -scale, scale)
    w_out = jax.random.uniform(ks[5], (O, H), jnp.float32, -scale, scale)
    b_out = jax.random.uniform(ks[6], (O,), jnp.float32, -scale, scale)

    ref = lstm_model_reference(x, w_ih, w_hh, b_ih, b_hh, w_out, b_out)

    # f32 MXU path: matches the reference tightly.
    out = lstm_model_forward(x, w_ih, w_hh, b_ih, b_hh, w_out, b_out,
                             matmul_dtype=jnp.float32)
    out = jax.block_until_ready(out)
    assert out.shape == (B, O)
    assert jnp.allclose(out, ref, atol=1e-4, rtol=1e-4), "f32 mismatch vs reference"

    # bf16-operand MXU path (f32 accumulate/state): relaxed tolerance.
    out_bf16 = lstm_model_forward(x, w_ih, w_hh, b_ih, b_hh, w_out, b_out,
                                  matmul_dtype=jnp.bfloat16)
    out_bf16 = jax.block_until_ready(out_bf16)
    assert out_bf16.shape == (B, O)
    assert jnp.allclose(out_bf16, ref, atol=5e-2, rtol=5e-2), "bf16 mismatch vs reference"

    print("KERNEL_OK")
</pallas_src>

<mosaic_0001>
module attributes {stable_mosaic.version = 11 : i64} {
  func.func @kernel(%arg0: i32, %arg1: i32, %arg2: memref<8x8x16xf32, #tpu.memory_space<vmem>>, %arg3: memref<16x512xf32, #tpu.memory_space<vmem>>, %arg4: memref<128x512xf32, #tpu.memory_space<vmem>>, %arg5: memref<1x512xf32, #tpu.memory_space<vmem>>, %arg6: memref<128x128xf32, #tpu.memory_space<vmem>>, %arg7: memref<1x128xf32, #tpu.memory_space<vmem>>, %arg8: memref<8x128xf32, #tpu.memory_space<vmem>>, %arg9: memref<8x8x512xf32, #tpu.memory_space<vmem>>, %arg10: memref<8x128xf32, #tpu.memory_space<vmem>>, %arg11: memref<8x128xf32, #tpu.memory_space<vmem>>, %arg12: memref<8x128xf32, #tpu.memory_space<vmem>>) attributes {dimension_semantics = [#tpu.dimension_semantics<parallel>, #tpu.dimension_semantics<arbitrary>], iteration_bounds = array<i64: 1, 1>, scalar_prefetch = 0 : i64, scratch_operands = 4 : i64, tpu.core_type = #tpu.core_type<tc>, window_params = [{transform_indices = @transform_0, window_bounds = array<i64: 8, 8, 16>}, {pipeline_mode = #tpu.pipeline_mode<synchronous>, transform_indices = @transform_1, window_bounds = array<i64: 16, 512>}, {pipeline_mode = #tpu.pipeline_mode<synchronous>, transform_indices = @transform_2, window_bounds = array<i64: 128, 512>}, {pipeline_mode = #tpu.pipeline_mode<synchronous>, transform_indices = @transform_3, window_bounds = array<i64: 1, 512>}, {pipeline_mode = #tpu.pipeline_mode<synchronous>, transform_indices = @transform_4, window_bounds = array<i64: 128, 128>}, {pipeline_mode = #tpu.pipeline_mode<synchronous>, transform_indices = @transform_5, window_bounds = array<i64: 1, 128>}, {transform_indices = @transform_6, window_bounds = array<i64: 8, 128>}]} {
    %c0_i32 = arith.constant 0 : i32
    %0 = arith.cmpi eq, %arg1, %c0_i32 : i32
    %1 = arith.extui %0 : i1 to i32
    %c0_i32_0 = arith.constant 0 : i32
    %2 = arith.cmpi ne, %1, %c0_i32_0 : i32
    scf.if %2 {
      %cst_75 = arith.constant 0.000000e+00 : f32
      %270 = vector.broadcast %cst_75 : f32 to vector<8x128xf32>
      %c0_76 = arith.constant 0 : index
      %c0_77 = arith.constant 0 : index
      %271 = vector.load %arg10[%c0_76, %c0_77] : memref<8x128xf32, #tpu.memory_space<vmem>>, vector<8x128xf32>
      tpu.vector_store %arg10[%c0_76, %c0_77], %270 {strides = array<i32>} : memref<8x128xf32, #tpu.memory_space<vmem>>, vector<8x128xf32>,
      %cst_78 = arith.constant 0.000000e+00 : f32
      %272 = vector.broadcast %cst_78 : f32 to vector<8x128xf32>
      %c0_79 = arith.constant 0 : index
      %c0_80 = arith.constant 0 : index
      %273 = vector.load %arg11[%c0_79, %c0_80] : memref<8x128xf32, #tpu.memory_space<vmem>>, vector<8x128xf32>
      tpu.vector_store %arg11[%c0_79, %c0_80], %272 {strides = array<i32>} : memref<8x128xf32, #tpu.memory_space<vmem>>, vector<8x128xf32>,
      %cst_81 = arith.constant 0.000000e+00 : f32
      %274 = vector.broadcast %cst_81 : f32 to vector<8x128xf32>
      %c0_82 = arith.constant 0 : index
      %c0_83 = arith.constant 0 : index
      %275 = vector.load %arg12[%c0_82, %c0_83] : memref<8x128xf32, #tpu.memory_space<vmem>>, vector<8x128xf32>
      tpu.vector_store %arg12[%c0_82, %c0_83], %274 {strides = array<i32>} : memref<8x128xf32, #tpu.memory_space<vmem>>, vector<8x128xf32>,
    } else {
    }
    %c0 = arith.constant 0 : index
    %c0_1 = arith.constant 0 : index
    %c0_2 = arith.constant 0 : index
    %3 = vector.load %arg2[%c0, %c0_1, %c0_2] : memref<8x8x16xf32, #tpu.memory_space<vmem>>, vector<8x8x16xf32>
    %4 = vector.shape_cast %3 : vector<8x8x16xf32> to vector<64x16xf32>
    %c0_3 = arith.constant 0 : index
    %c0_4 = arith.constant 0 : index
    %5 = vector.load %arg3[%c0_3, %c0_4] : memref<16x512xf32, #tpu.memory_space<vmem>>, vector<16x512xf32>
    %cst = arith.constant dense<0.000000e+00> : vector<64x512xf32>
    %6 = tpu.matmul %4, %5, %cst {dimension_numbers = #tpu.dot_dimension_numbers<[1], [0], [0], [1], [0, 0, 1, 1], [], []>} : vector<64x16xf32>, vector<16x512xf32>, vector<64x512xf32> -> vector<64x512xf32>
    %c0_5 = arith.constant 0 : index
    %c0_6 = arith.constant 0 : index
    %7 = vector.load %arg5[%c0_5, %c0_6] : memref<1x512xf32, #tpu.memory_space<vmem>>, vector<1x512xf32>
    %8 = vector.broadcast %7 : vector<1x512xf32> to vector<64x512xf32>
    %9 = arith.addf %6, %8 : vector<64x512xf32>
    %10 = vector.shape_cast %9 : vector<64x512xf32> to vector<8x8x512xf32>
    %c0_7 = arith.constant 0 : index
    %c0_8 = arith.constant 0 : index
    %c0_9 = arith.constant 0 : index
    %11 = vector.load %arg9[%c0_7, %c0_8, %c0_9] : memref<8x8x512xf32, #tpu.memory_space<vmem>>, vector<8x8x512xf32>
    tpu.vector_store %arg9[%c0_7, %c0_8, %c0_9], %10 {strides = array<i32>} : memref<8x8x512xf32, #tpu.memory_space<vmem>>, vector<8x8x512xf32>,
    %c0_10 = arith.constant 0 : index
    %c0_11 = arith.constant 0 : index
    %12 = vector.load %arg4[%c0_10, %c0_11] : memref<128x512xf32, #tpu.memory_space<vmem>>, vector<128x512xf32>
    %c0_12 = arith.constant 0 : index
    %c0_13 = arith.constant 0 : index
    %13 = vector.load %arg10[%c0_12, %c0_13] : memref<8x128xf32, #tpu.memory_space<vmem>>, vector<8x128xf32>
    %c0_14 = arith.constant 0 : index
    %c0_15 = arith.constant 0 : index
    %14 = vector.load %arg11[%c0_14, %c0_15] : memref<8x128xf32, #tpu.memory_space<vmem>>, vector<8x128xf32>
    %c0_16 = arith.constant 0 : index
    %c0_17 = arith.constant 0 : index
    %15 = vector.load %arg12[%c0_16, %c0_17] : memref<8x128xf32, #tpu.memory_space<vmem>>, vector<8x128xf32>
    %c0_i32_18 = arith.constant 0 : i32
    %16 = arith.index_cast %c0_i32_18 : i32 to index
    %c0_19 = arith.constant 0 : index
    %c0_20 = arith.constant 0 : index
    %17 = vector.load %arg9[%16, %c0_19, %c0_20] : memref<8x8x512xf32, #tpu.memory_space<vmem>>, vector<1x8x512xf32>
    %18 = vector.shape_cast %17 : vector<1x8x512xf32> to vector<8x512xf32>
    %cst_21 = arith.constant dense<0.000000e+00> : vector<8x512xf32>
    %19 = tpu.matmul %13, %12, %cst_21 {dimension_numbers = #tpu.dot_dimension_numbers<[1], [0], [0], [1], [0, 0, 1, 1], [], []>} : vector<8x128xf32>, vector<128x512xf32>, vector<8x512xf32> -> vector<8x512xf32>
    %20 = arith.addf %18, %19 : vector<8x512xf32>
    %21 = vector.extract_strided_slice %20 {offsets = [0, 0], sizes = [8, 128], strides = [1, 1]} : vector<8x512xf32> to vector<8x128xf32>
    %22 = arith.negf %21 : vector<8x128xf32>
    %23 = math.exp %22 : vector<8x128xf32>
    %cst_22 = arith.constant 1.000000e+00 : f32
    %24 = vector.broadcast %cst_22 : f32 to vector<8x128xf32>
    %25 = arith.addf %24, %23 : vector<8x128xf32>
    %26 = arith.divf %24, %25 : vector<8x128xf32>
    %27 = vector.extract_strided_slice %20 {offsets = [0, 128], sizes = [8, 128], strides = [1, 1]} : vector<8x512xf32> to vector<8x128xf32>
    %28 = arith.negf %27 : vector<8x128xf32>
    %29 = math.exp %28 : vector<8x128xf32>
    %cst_23 = arith.constant 1.000000e+00 : f32
    %30 = vector.broadcast %cst_23 : f32 to vector<8x128xf32>
    %31 = arith.addf %30, %29 : vector<8x128xf32>
    %32 = arith.divf %30, %31 : vector<8x128xf32>
    %33 = vector.extract_strided_slice %20 {offsets = [0, 256], sizes = [8, 128], strides = [1, 1]} : vector<8x512xf32> to vector<8x128xf32>
    %34 = math.tanh %33 : vector<8x128xf32>
    %35 = vector.extract_strided_slice %20 {offsets = [0, 384], sizes = [8, 128], strides = [1, 1]} : vector<8x512xf32> to vector<8x128xf32>
    %36 = arith.negf %35 : vector<8x128xf32>
    %37 = math.exp %36 : vector<8x128xf32>
    %cst_24 = arith.constant 1.000000e+00 : f32
    %38 = vector.broadcast %cst_24 : f32 to vector<8x128xf32>
    %39 = arith.addf %38, %37 : vector<8x128xf32>
    %40 = arith.divf %38, %39 : vector<8x128xf32>
    %41 = arith.mulf %32, %14 : vector<8x128xf32>
    %42 = arith.mulf %26, %34 : vector<8x128xf32>
    %43 = arith.addf %41, %42 : vector<8x128xf32>
    %44 = math.tanh %43 : vector<8x128xf32>
    %45 = arith.mulf %40, %44 : vector<8x128xf32>
    %46 = arith.addf %15, %45 : vector<8x128xf32>
    %c1_i32 = arith.constant 1 : i32
    %47 = arith.index_cast %c1_i32 : i32 to index
    %c0_25 = arith.constant 0 : index
    %c0_26 = arith.constant 0 : index
    %48 = vector.load %arg9[%47, %c0_25, %c0_26] : memref<8x8x512xf32, #tpu.memory_space<vmem>>, vector<1x8x512xf32>
    %49 = vector.shape_cast %48 : vector<1x8x512xf32> to vector<8x512xf32>
    %cst_27 = arith.constant dense<0.000000e+00> : vector<8x512xf32>
    %50 = tpu.matmul %45, %12, %cst_27 {dimension_numbers = #tpu.dot_dimension_numbers<[1], [0], [0], [1], [0, 0, 1, 1], [], []>} : vector<8x128xf32>, vector<128x512xf32>, vector<8x512xf32> -> vector<8x512xf32>
    %51 = arith.addf %49, %50 : vector<8x512xf32>
    %52 = vector.extract_strided_slice %51 {offsets = [0, 0], sizes = [8, 128], strides = [1, 1]} : vector<8x512xf32> to vector<8x128xf32>
    %53 = arith.negf %52 : vector<8x128xf32>
    %54 = math.exp %53 : vector<8x128xf32>
    %cst_28 = arith.constant 1.000000e+00 : f32
    %55 = vector.broadcast %cst_28 : f32 to vector<8x128xf32>
    %56 = arith.addf %55, %54 : vector<8x128xf32>
    %57 = arith.divf %55, %56 : vector<8x128xf32>
    %58 = vector.extract_strided_slice %51 {offsets = [0, 128], sizes = [8, 128], strides = [1, 1]} : vector<8x512xf32> to vector<8x128xf32>
    %59 = arith.negf %58 : vector<8x128xf32>
    %60 = math.exp %59 : vector<8x128xf32>
    %cst_29 = arith.constant 1.000000e+00 : f32
    %61 = vector.broadcast %cst_29 : f32 to vector<8x128xf32>
    %62 = arith.addf %61, %60 : vector<8x128xf32>
    %63 = arith.divf %61, %62 : vector<8x128xf32>
    %64 = vector.extract_strided_slice %51 {offsets = [0, 256], sizes = [8, 128], strides = [1, 1]} : vector<8x512xf32> to vector<8x128xf32>
    %65 = math.tanh %64 : vector<8x128xf32>
    %66 = vector.extract_strided_slice %51 {offsets = [0, 384], sizes = [8, 128], strides = [1, 1]} : vector<8x512xf32> to vector<8x128xf32>
    %67 = arith.negf %66 : vector<8x128xf32>
    %68 = math.exp %67 : vector<8x128xf32>
    %cst_30 = arith.constant 1.000000e+00 : f32
    %69 = vector.broadcast %cst_30 : f32 to vector<8x128xf32>
    %70 = arith.addf %69, %68 : vector<8x128xf32>
    %71 = arith.divf %69, %70 : vector<8x128xf32>
    %72 = arith.mulf %63, %43 : vector<8x128xf32>
    %73 = arith.mulf %57, %65 : vector<8x128xf32>
    %74 = arith.addf %72, %73 : vector<8x128xf32>
    %75 = math.tanh %74 : vector<8x128xf32>
    %76 = arith.mulf %71, %75 : vector<8x128xf32>
    %77 = arith.addf %46, %76 : vector<8x128xf32>
    %c2_i32 = arith.constant 2 : i32
    %78 = arith.index_cast %c2_i32 : i32 to index
    %c0_31 = arith.constant 0 : index
    %c0_32 = arith.constant 0 : index
    %79 = vector.load %arg9[%78, %c0_31, %c0_32] : memref<8x8x512xf32, #tpu.memory_space<vmem>>, vector<1x8x512xf32>
    %80 = vector.shape_cast %79 : vector<1x8x512xf32> to vector<8x512xf32>
    %cst_33 = arith.constant dense<0.000000e+00> : vector<8x512xf32>
    %81 = tpu.matmul %76, %12, %cst_33 {dimension_numbers = #tpu.dot_dimension_numbers<[1], [0], [0], [1], [0, 0, 1, 1], [], []>} : vector<8x128xf32>, vector<128x512xf32>, vector<8x512xf32> -> vector<8x512xf32>
    %82 = arith.addf %80, %81 : vector<8x512xf32>
    %83 = vector.extract_strided_slice %82 {offsets = [0, 0], sizes = [8, 128], strides = [1, 1]} : vector<8x512xf32> to vector<8x128xf32>
    %84 = arith.negf %83 : vector<8x128xf32>
    %85 = math.exp %84 : vector<8x128xf32>
    %cst_34 = arith.constant 1.000000e+00 : f32
    %86 = vector.broadcast %cst_34 : f32 to vector<8x128xf32>
    %87 = arith.addf %86, %85 : vector<8x128xf32>
    %88 = arith.divf %86, %87 : vector<8x128xf32>
    %89 = vector.extract_strided_slice %82 {offsets = [0, 128], sizes = [8, 128], strides = [1, 1]} : vector<8x512xf32> to vector<8x128xf32>
    %90 = arith.negf %89 : vector<8x128xf32>
    %91 = math.exp %90 : vector<8x128xf32>
    %cst_35 = arith.constant 1.000000e+00 : f32
    %92 = vector.broadcast %cst_35 : f32 to vector<8x128xf32>
    %93 = arith.addf %92, %91 : vector<8x128xf32>
    %94 = arith.divf %92, %93 : vector<8x128xf32>
    %95 = vector.extract_strided_slice %82 {offsets = [0, 256], sizes = [8, 128], strides = [1, 1]} : vector<8x512xf32> to vector<8x128xf32>
    %96 = math.tanh %95 : vector<8x128xf32>
    %97 = vector.extract_strided_slice %82 {offsets = [0, 384], sizes = [8, 128], strides = [1, 1]} : vector<8x512xf32> to vector<8x128xf32>
    %98 = arith.negf %97 : vector<8x128xf32>
    %99 = math.exp %98 : vector<8x128xf32>
    %cst_36 = arith.constant 1.000000e+00 : f32
    %100 = vector.broadcast %cst_36 : f32 to vector<8x128xf32>
    %101 = arith.addf %100, %99 : vector<8x128xf32>
    %102 = arith.divf %100, %101 : vector<8x128xf32>
    %103 = arith.mulf %94, %74 : vector<8x128xf32>
    %104 = arith.mulf %88, %96 : vector<8x128xf32>
    %105 = arith.addf %103, %104 : vector<8x128xf32>
    %106 = math.tanh %105 : vector<8x128xf32>
    %107 = arith.mulf %102, %106 : vector<8x128xf32>
    %108 = arith.addf %77, %107 : vector<8x128xf32>
    %c3_i32 = arith.constant 3 : i32
    %109 = arith.index_cast %c3_i32 : i32 to index
    %c0_37 = arith.constant 0 : index
    %c0_38 = arith.constant 0 : index
    %110 = vector.load %arg9[%109, %c0_37, %c0_38] : memref<8x8x512xf32, #tpu.memory_space<vmem>>, vector<1x8x512xf32>
    %111 = vector.shape_cast %110 : vector<1x8x512xf32> to vector<8x512xf32>
    %cst_39 = arith.constant dense<0.000000e+00> : vector<8x512xf32>
    %112 = tpu.matmul %107, %12, %cst_39 {dimension_numbers = #tpu.dot_dimension_numbers<[1], [0], [0], [1], [0, 0, 1, 1], [], []>} : vector<8x128xf32>, vector<128x512xf32>, vector<8x512xf32> -> vector<8x512xf32>
    %113 = arith.addf %111, %112 : vector<8x512xf32>
    %114 = vector.extract_strided_slice %113 {offsets = [0, 0], sizes = [8, 128], strides = [1, 1]} : vector<8x512xf32> to vector<8x128xf32>
    %115 = arith.negf %114 : vector<8x128xf32>
    %116 = math.exp %115 : vector<8x128xf32>
    %cst_40 = arith.constant 1.000000e+00 : f32
    %117 = vector.broadcast %cst_40 : f32 to vector<8x128xf32>
    %118 = arith.addf %117, %116 : vector<8x128xf32>
    %119 = arith.divf %117, %118 : vector<8x128xf32>
    %120 = vector.extract_strided_slice %113 {offsets = [0, 128], sizes = [8, 128], strides = [1, 1]} : vector<8x512xf32> to vector<8x128xf32>
    %121 = arith.negf %120 : vector<8x128xf32>
    %122 = math.exp %121 : vector<8x128xf32>
    %cst_41 = arith.constant 1.000000e+00 : f32
    %123 = vector.broadcast %cst_41 : f32 to vector<8x128xf32>
    %124 = arith.addf %123, %122 : vector<8x128xf32>
    %125 = arith.divf %123, %124 : vector<8x128xf32>
    %126 = vector.extract_strided_slice %113 {offsets = [0, 256], sizes = [8, 128], strides = [1, 1]} : vector<8x512xf32> to vector<8x128xf32>
    %127 = math.tanh %126 : vector<8x128xf32>
    %128 = vector.extract_strided_slice %113 {offsets = [0, 384], sizes = [8, 128], strides = [1, 1]} : vector<8x512xf32> to vector<8x128xf32>
    %129 = arith.negf %128 : vector<8x128xf32>
    %130 = math.exp %129 : vector<8x128xf32>
    %cst_42 = arith.constant 1.000000e+00 : f32
    %131 = vector.broadcast %cst_42 : f32 to vector<8x128xf32>
    %132 = arith.addf %131, %130 : vector<8x128xf32>
    %133 = arith.divf %131, %132 : vector<8x128xf32>
    %134 = arith.mulf %125, %105 : vector<8x128xf32>
    %135 = arith.mulf %119, %127 : vector<8x128xf32>
    %136 = arith.addf %134, %135 : vector<8x128xf32>
    %137 = math.tanh %136 : vector<8x128xf32>
    %138 = arith.mulf %133, %137 : vector<8x128xf32>
    %139 = arith.addf %108, %138 : vector<8x128xf32>
    %c4_i32 = arith.constant 4 : i32
    %140 = arith.index_cast %c4_i32 : i32 to index
    %c0_43 = arith.constant 0 : index
    %c0_44 = arith.constant 0 : index
    %141 = vector.load %arg9[%140, %c0_43, %c0_44] : memref<8x8x512xf32, #tpu.memory_space<vmem>>, vector<1x8x512xf32>
    %142 = vector.shape_cast %141 : vector<1x8x512xf32> to vector<8x512xf32>
    %cst_45 = arith.constant dense<0.000000e+00> : vector<8x512xf32>
    %143 = tpu.matmul %138, %12, %cst_45 {dimension_numbers = #tpu.dot_dimension_numbers<[1], [0], [0], [1], [0, 0, 1, 1], [], []>} : vector<8x128xf32>, vector<128x512xf32>, vector<8x512xf32> -> vector<8x512xf32>
    %144 = arith.addf %142, %143 : vector<8x512xf32>
    %145 = vector.extract_strided_slice %144 {offsets = [0, 0], sizes = [8, 128], strides = [1, 1]} : vector<8x512xf32> to vector<8x128xf32>
    %146 = arith.negf %145 : vector<8x128xf32>
    %147 = math.exp %146 : vector<8x128xf32>
    %cst_46 = arith.constant 1.000000e+00 : f32
    %148 = vector.broadcast %cst_46 : f32 to vector<8x128xf32>
    %149 = arith.addf %148, %147 : vector<8x128xf32>
    %150 = arith.divf %148, %149 : vector<8x128xf32>
    %151 = vector.extract_strided_slice %144 {offsets = [0, 128], sizes = [8, 128], strides = [1, 1]} : vector<8x512xf32> to vector<8x128xf32>
    %152 = arith.negf %151 : vector<8x128xf32>
    %153 = math.exp %152 : vector<8x128xf32>
    %cst_47 = arith.constant 1.000000e+00 : f32
    %154 = vector.broadcast %cst_47 : f32 to vector<8x128xf32>
    %155 = arith.addf %154, %153 : vector<8x128xf32>
    %156 = arith.divf %154, %155 : vector<8x128xf32>
    %157 = vector.extract_strided_slice %144 {offsets = [0, 256], sizes = [8, 128], strides = [1, 1]} : vector<8x512xf32> to vector<8x128xf32>
    %158 = math.tanh %157 : vector<8x128xf32>
    %159 = vector.extract_strided_slice %144 {offsets = [0, 384], sizes = [8, 128], strides = [1, 1]} : vector<8x512xf32> to vector<8x128xf32>
    %160 = arith.negf %159 : vector<8x128xf32>
    %161 = math.exp %160 : vector<8x128xf32>
    %cst_48 = arith.constant 1.000000e+00 : f32
    %162 = vector.broadcast %cst_48 : f32 to vector<8x128xf32>
    %163 = arith.addf %162, %161 : vector<8x128xf32>
    %164 = arith.divf %162, %163 : vector<8x128xf32>
    %165 = arith.mulf %156, %136 : vector<8x128xf32>
    %166 = arith.mulf %150, %158 : vector<8x128xf32>
    %167 = arith.addf %165, %166 : vector<8x128xf32>
    %168 = math.tanh %167 : vector<8x128xf32>
    %169 = arith.mulf %164, %168 : vector<8x128xf32>
    %170 = arith.addf %139, %169 : vector<8x128xf32>
    %c5_i32 = arith.constant 5 : i32
    %171 = arith.index_cast %c5_i32 : i32 to index
    %c0_49 = arith.constant 0 : index
    %c0_50 = arith.constant 0 : index
    %172 = vector.load %arg9[%171, %c0_49, %c0_50] : memref<8x8x512xf32, #tpu.memory_space<vmem>>, vector<1x8x512xf32>
    %173 = vector.shape_cast %172 : vector<1x8x512xf32> to vector<8x512xf32>
    %cst_51 = arith.constant dense<0.000000e+00> : vector<8x512xf32>
    %174 = tpu.matmul %169, %12, %cst_51 {dimension_numbers = #tpu.dot_dimension_numbers<[1], [0], [0], [1], [0, 0, 1, 1], [], []>} : vector<8x128xf32>, vector<128x512xf32>, vector<8x512xf32> -> vector<8x512xf32>
    %175 = arith.addf %173, %174 : vector<8x512xf32>
    %176 = vector.extract_strided_slice %175 {offsets = [0, 0], sizes = [8, 128], strides = [1, 1]} : vector<8x512xf32> to vector<8x128xf32>
    %177 = arith.negf %176 : vector<8x128xf32>
    %178 = math.exp %177 : vector<8x128xf32>
    %cst_52 = arith.constant 1.000000e+00 : f32
    %179 = vector.broadcast %cst_52 : f32 to vector<8x128xf32>
    %180 = arith.addf %179, %178 : vector<8x128xf32>
    %181 = arith.divf %179, %180 : vector<8x128xf32>
    %182 = vector.extract_strided_slice %175 {offsets = [0, 128], sizes = [8, 128], strides = [1, 1]} : vector<8x512xf32> to vector<8x128xf32>
    %183 = arith.negf %182 : vector<8x128xf32>
    %184 = math.exp %183 : vector<8x128xf32>
    %cst_53 = arith.constant 1.000000e+00 : f32
    %185 = vector.broadcast %cst_53 : f32 to vector<8x128xf32>
    %186 = arith.addf %185, %184 : vector<8x128xf32>
    %187 = arith.divf %185, %186 : vector<8x128xf32>
    %188 = vector.extract_strided_slice %175 {offsets = [0, 256], sizes = [8, 128], strides = [1, 1]} : vector<8x512xf32> to vector<8x128xf32>
    %189 = math.tanh %188 : vector<8x128xf32>
    %190 = vector.extract_strided_slice %175 {offsets = [0, 384], sizes = [8, 128], strides = [1, 1]} : vector<8x512xf32> to vector<8x128xf32>
    %191 = arith.negf %190 : vector<8x128xf32>
    %192 = math.exp %191 : vector<8x128xf32>
    %cst_54 = arith.constant 1.000000e+00 : f32
    %193 = vector.broadcast %cst_54 : f32 to vector<8x128xf32>
    %194 = arith.addf %193, %192 : vector<8x128xf32>
    %195 = arith.divf %193, %194 : vector<8x128xf32>
    %196 = arith.mulf %187, %167 : vector<8x128xf32>
    %197 = arith.mulf %181, %189 : vector<8x128xf32>
    %198 = arith.addf %196, %197 : vector<8x128xf32>
    %199 = math.tanh %198 : vector<8x128xf32>
    %200 = arith.mulf %195, %199 : vector<8x128xf32>
    %201 = arith.addf %170, %200 : vector<8x128xf32>
    %c6_i32 = arith.constant 6 : i32
    %202 = arith.index_cast %c6_i32 : i32 to index
    %c0_55 = arith.constant 0 : index
    %c0_56 = arith.constant 0 : index
    %203 = vector.load %arg9[%202, %c0_55, %c0_56] : memref<8x8x512xf32, #tpu.memory_space<vmem>>, vector<1x8x512xf32>
    %204 = vector.shape_cast %203 : vector<1x8x512xf32> to vector<8x512xf32>
    %cst_57 = arith.constant dense<0.000000e+00> : vector<8x512xf32>
    %205 = tpu.matmul %200, %12, %cst_57 {dimension_numbers = #tpu.dot_dimension_numbers<[1], [0], [0], [1], [0, 0, 1, 1], [], []>} : vector<8x128xf32>, vector<128x512xf32>, vector<8x512xf32> -> vector<8x512xf32>
    %206 = arith.addf %204, %205 : vector<8x512xf32>
    %207 = vector.extract_strided_slice %206 {offsets = [0, 0], sizes = [8, 128], strides = [1, 1]} : vector<8x512xf32> to vector<8x128xf32>
    %208 = arith.negf %207 : vector<8x128xf32>
    %209 = math.exp %208 : vector<8x128xf32>
    %cst_58 = arith.constant 1.000000e+00 : f32
    %210 = vector.broadcast %cst_58 : f32 to vector<8x128xf32>
    %211 = arith.addf %210, %209 : vector<8x128xf32>
    %212 = arith.divf %210, %211 : vector<8x128xf32>
    %213 = vector.extract_strided_slice %206 {offsets = [0, 128], sizes = [8, 128], strides = [1, 1]} : vector<8x512xf32> to vector<8x128xf32>
    %214 = arith.negf %213 : vector<8x128xf32>
    %215 = math.exp %214 : vector<8x128xf32>
    %cst_59 = arith.constant 1.000000e+00 : f32
    %216 = vector.broadcast %cst_59 : f32 to vector<8x128xf32>
    %217 = arith.addf %216, %215 : vector<8x128xf32>
    %218 = arith.divf %216, %217 : vector<8x128xf32>
    %219 = vector.extract_strided_slice %206 {offsets = [0, 256], sizes = [8, 128], strides = [1, 1]} : vector<8x512xf32> to vector<8x128xf32>
    %220 = math.tanh %219 : vector<8x128xf32>
    %221 = vector.extract_strided_slice %206 {offsets = [0, 384], sizes = [8, 128], strides = [1, 1]} : vector<8x512xf32> to vector<8x128xf32>
    %222 = arith.negf %221 : vector<8x128xf32>
    %223 = math.exp %222 : vector<8x128xf32>
    %cst_60 = arith.constant 1.000000e+00 : f32
    %224 = vector.broadcast %cst_60 : f32 to vector<8x128xf32>
    %225 = arith.addf %224, %223 : vector<8x128xf32>
    %226 = arith.divf %224, %225 : vector<8x128xf32>
    %227 = arith.mulf %218, %198 : vector<8x128xf32>
    %228 = arith.mulf %212, %220 : vector<8x128xf32>
    %229 = arith.addf %227, %228 : vector<8x128xf32>
    %230 = math.tanh %229 : vector<8x128xf32>
    %231 = arith.mulf %226, %230 : vector<8x128xf32>
    %232 = arith.addf %201, %231 : vector<8x128xf32>
    %c7_i32 = arith.constant 7 : i32
    %233 = arith.index_cast %c7_i32 : i32 to index
    %c0_61 = arith.constant 0 : index
    %c0_62 = arith.constant 0 : index
    %234 = vector.load %arg9[%233, %c0_61, %c0_62] : memref<8x8x512xf32, #tpu.memory_space<vmem>>, vector<1x8x512xf32>
    %235 = vector.shape_cast %234 : vector<1x8x512xf32> to vector<8x512xf32>
    %cst_63 = arith.constant dense<0.000000e+00> : vector<8x512xf32>
    %236 = tpu.matmul %231, %12, %cst_63 {dimension_numbers = #tpu.dot_dimension_numbers<[1], [0], [0], [1], [0, 0, 1, 1], [], []>} : vector<8x128xf32>, vector<128x512xf32>, vector<8x512xf32> -> vector<8x512xf32>
    %237 = arith.addf %235, %236 : vector<8x512xf32>
    %238 = vector.extract_strided_slice %237 {offsets = [0, 0], sizes = [8, 128], strides = [1, 1]} : vector<8x512xf32> to vector<8x128xf32>
    %239 = arith.negf %238 : vector<8x128xf32>
    %240 = math.exp %239 : vector<8x128xf32>
    %cst_64 = arith.constant 1.000000e+00 : f32
    %241 = vector.broadcast %cst_64 : f32 to vector<8x128xf32>
    %242 = arith.addf %241, %240 : vector<8x128xf32>
    %243 = arith.divf %241, %242 : vector<8x128xf32>
    %244 = vector.extract_strided_slice %237 {offsets = [0, 128], sizes = [8, 128], strides = [1, 1]} : vector<8x512xf32> to vector<8x128xf32>
    %245 = arith.negf %244 : vector<8x128xf32>
    %246 = math.exp %245 : vector<8x128xf32>
    %cst_65 = arith.constant 1.000000e+00 : f32
    %247 = vector.broadcast %cst_65 : f32 to vector<8x128xf32>
    %248 = arith.addf %247, %246 : vector<8x128xf32>
    %249 = arith.divf %247, %248 : vector<8x128xf32>
    %250 = vector.extract_strided_slice %237 {offsets = [0, 256], sizes = [8, 128], strides = [1, 1]} : vector<8x512xf32> to vector<8x128xf32>
    %251 = math.tanh %250 : vector<8x128xf32>
    %252 = vector.extract_strided_slice %237 {offsets = [0, 384], sizes = [8, 128], strides = [1, 1]} : vector<8x512xf32> to vector<8x128xf32>
    %253 = arith.negf %252 : vector<8x128xf32>
    %254 = math.exp %253 : vector<8x128xf32>
    %cst_66 = arith.constant 1.000000e+00 : f32
    %255 = vector.broadcast %cst_66 : f32 to vector<8x128xf32>
    %256 = arith.addf %255, %254 : vector<8x128xf32>
    %257 = arith.divf %255, %256 : vector<8x128xf32>
    %258 = arith.mulf %249, %229 : vector<8x128xf32>
    %259 = arith.mulf %243, %251 : vector<8x128xf32>
    %260 = arith.addf %258, %259 : vector<8x128xf32>
    %261 = math.tanh %260 : vector<8x128xf32>
    %262 = arith.mulf %257, %261 : vector<8x128xf32>
    %263 = arith.addf %232, %262 : vector<8x128xf32>
    %c8_i32 = arith.constant 8 : i32
    %c0_67 = arith.constant 0 : index
    %c0_68 = arith.constant 0 : index
    %264 = vector.load %arg10[%c0_67, %c0_68] : memref<8x128xf32, #tpu.memory_space<vmem>>, vector<8x128xf32>
    tpu.vector_store %arg10[%c0_67, %c0_68], %262 {strides = array<i32>} : memref<8x128xf32, #tpu.memory_space<vmem>>, vector<8x128xf32>,
    %c0_69 = arith.constant 0 : index
    %c0_70 = arith.constant 0 : index
    %265 = vector.load %arg11[%c0_69, %c0_70] : memref<8x128xf32, #tpu.memory_space<vmem>>, vector<8x128xf32>
    tpu.vector_store %arg11[%c0_69, %c0_70], %260 {strides = array<i32>} : memref<8x128xf32, #tpu.memory_space<vmem>>, vector<8x128xf32>,
    %c0_71 = arith.constant 0 : index
    %c0_72 = arith.constant 0 : index
    %266 = vector.load %arg12[%c0_71, %c0_72] : memref<8x128xf32, #tpu.memory_space<vmem>>, vector<8x128xf32>
    tpu.vector_store %arg12[%c0_71, %c0_72], %263 {strides = array<i32>} : memref<8x128xf32, #tpu.memory_space<vmem>>, vector<8x128xf32>,
    %c0_i32_73 = arith.constant 0 : i32
    %267 = arith.cmpi eq, %arg1, %c0_i32_73 : i32
    %268 = arith.extui %267 : i1 to i32
    %c0_i32_74 = arith.constant 0 : i32
    %269 = arith.cmpi ne, %268, %c0_i32_74 : i32
    scf.if %269 {
      %c0_75 = arith.constant 0 : index
      %c0_76 = arith.constant 0 : index
      %270 = vector.load %arg6[%c0_75, %c0_76] : memref<128x128xf32, #tpu.memory_space<vmem>>, vector<128x128xf32>
      %cst_77 = arith.constant dense<0.000000e+00> : vector<8x128xf32>
      %271 = tpu.matmul %263, %270, %cst_77 {dimension_numbers = #tpu.dot_dimension_numbers<[1], [0], [0], [1], [0, 0, 1, 1], [], []>} : vector<8x128xf32>, vector<128x128xf32>, vector<8x128xf32> -> vector<8x128xf32>
      %c0_78 = arith.constant 0 : index
      %c0_79 = arith.constant 0 : index
      %272 = vector.load %arg7[%c0_78, %c0_79] : memref<1x128xf32, #tpu.memory_space<vmem>>, vector<1x128xf32>
      %273 = vector.broadcast %272 : vector<1x128xf32> to vector<8x128xf32>
      %274 = arith.addf %271, %273 : vector<8x128xf32>
      %275 = arith.negf %274 : vector<8x128xf32>
      %276 = math.exp %275 : vector<8x128xf32>
      %cst_80 = arith.constant 1.000000e+00 : f32
      %277 = vector.broadcast %cst_80 : f32 to vector<8x128xf32>
      %278 = arith.addf %277, %276 : vector<8x128xf32>
      %279 = arith.divf %277, %278 : vector<8x128xf32>
      %c0_81 = arith.constant 0 : index
      %c0_82 = arith.constant 0 : index
      %280 = vector.load %arg8[%c0_81, %c0_82] : memref<8x128xf32, #tpu.memory_space<vmem>>, vector<8x128xf32>
      tpu.vector_store %arg8[%c0_81, %c0_82], %279 {strides = array<i32>} : memref<8x128xf32, #tpu.memory_space<vmem>>, vector<8x128xf32>,
    } else {
    }
    return
  }
  func.func @transform_0(%arg0: i32, %arg1: i32) -> (i32, i32, i32) {
    %c0_i32 = arith.constant 0 : i32
    %c0_i32_0 = arith.constant 0 : i32
    return %arg1, %arg0, %c0_i32 : i32, i32, i32
  }
  func.func @transform_1(%arg0: i32, %arg1: i32) -> (i32, i32) {
    %c0_i32 = arith.constant 0 : i32
    %c0_i32_0 = arith.constant 0 : i32
    %c0_i32_1 = arith.constant 0 : i32
    return %c0_i32, %c0_i32_0 : i32, i32
  }
  func.func @transform_2(%arg0: i32, %arg1: i32) -> (i32, i32) {
    %c0_i32 = arith.constant 0 : i32
    %c0_i32_0 = arith.constant 0 : i32
    %c0_i32_1 = arith.constant 0 : i32
    return %c0_i32, %c0_i32_0 : i32, i32
  }
  func.func @transform_3(%arg0: i32, %arg1: i32) -> (i32, i32) {
    %c0_i32 = arith.constant 0 : i32
    %c0_i32_0 = arith.constant 0 : i32
    %c0_i32_1 = arith.constant 0 : i32
    return %c0_i32, %c0_i32_0 : i32, i32
  }
  func.func @transform_4(%arg0: i32, %arg1: i32) -> (i32, i32) {
    %c0_i32 = arith.constant 0 : i32
    %c0_i32_0 = arith.constant 0 : i32
    %c0_i32_1 = arith.constant 0 : i32
    return %c0_i32, %c0_i32_0 : i32, i32
  }
  func.func @transform_5(%arg0: i32, %arg1: i32) -> (i32, i32) {
    %c0_i32 = arith.constant 0 : i32
    %c0_i32_0 = arith.constant 0 : i32
    %c0_i32_1 = arith.constant 0 : i32
    return %c0_i32, %c0_i32_0 : i32, i32
  }
  func.func @transform_6(%arg0: i32, %arg1: i32) -> (i32, i32) {
    %c0_i32 = arith.constant 0 : i32
    %c0_i32_0 = arith.constant 0 : i32
    return %arg0, %c0_i32 : i32, i32
  }
}

</mosaic_0001>

<llo_original>
// kernel: tpu_custom_call.1
$region0: #{tpu_custom_call.1}
  #allocation0 [shape = 'u32[]', space=smem, size = 0x4, offset = 0x4, fixed_abs, tag = 'smem constant byte address 0x4 - core index']
  #allocation1 [shape = 'u32[144,128]{1,0:T(1,128)}', space=vmem, size = 0x12000, scoped, tag = 'internal scratch']
  #allocation2 [shape = 'f32[8,8,512]{2,1,0:T(8,128)}', space=vmem, size = 0x20000, scoped, tag = 'scratch operand']
  #allocation3 [shape = 'f32[8,128]{1,0:T(8,128)}', space=vmem, size = 0x1000, scoped, tag = 'scratch operand']
  #allocation4 [shape = 'f32[8,128]{1,0:T(8,128)}', space=vmem, size = 0x1000, scoped, tag = 'scratch operand']
  #allocation5 [shape = 'f32[8,128]{1,0:T(8,128)}', space=vmem, size = 0x1000, scoped, tag = 'scratch operand']
  %s0 = inlined_call_operand.hbm [shape: f32[8,8,16], index: 0, kind: input, shape index: {}]
  %s1 = inlined_call_operand.hbm [shape: f32[16,512], index: 1, kind: input, shape index: {}]
  %s2 = inlined_call_operand.hbm [shape: f32[128,512], index: 2, kind: input, shape index: {}]
  %s3 = inlined_call_operand.vmem [shape: f32[1,512], index: 3, kind: input, shape index: {}]
  %s4 = inlined_call_operand.hbm [shape: f32[128,128], index: 4, kind: input, shape index: {}]
  %s5 = inlined_call_operand.vmem [shape: f32[1,128], index: 5, kind: input, shape index: {}]
  %s6 = inlined_call_operand.hbm [shape: f32[8,128], index: 6, kind: output, shape index: {}]
  %s7 = sld [smem:[#allocation0]]
  $region58: #{tpu_custom_call.1} parent=0
    _
  %s9 = ssub.s32 1, %s7
  %s10 = scalar_select 0, %s9, %s7
  $region1: #{tpu_custom_call.1} parent=0
    #allocation6 [shape = 'u8[32768]{0}', space=vmem, size = 0x8000, scoped, tag = 'input window, operand 0, single buffered']
    #allocation7 [shape = 's32[1]{0}', space=sflag, size = 0x4, scoped, tag = 'scoped memory for tpu_custom_call.1']
    #allocation8 [shape = 's32[1]{0}', space=sflag, size = 0x4, scoped, tag = 'scoped memory for tpu_custom_call.1']
    #allocation9 [shape = 'u8[32768]{0}', space=vmem, size = 0x8000, scoped, tag = 'input window, operand 1, single buffered']
    #allocation10 [shape = 's32[1]{0}', space=sflag, size = 0x4, scoped, tag = 'scoped memory for tpu_custom_call.1']
    #allocation11 [shape = 'u8[262144]{0}', space=vmem, size = 0x40000, scoped, tag = 'input window, operand 2, single buffered']
    #allocation12 [shape = 'u8[65536]{0}', space=vmem, size = 0x10000, scoped, tag = 'input window, operand 4, single buffered']
    #allocation13 [shape = 's32[1]{0}', space=sflag, size = 0x4, scoped, tag = 'scoped memory for tpu_custom_call.1']
    #allocation14 [shape = 'u8[4096]{0}', space=vmem, size = 0x1000, scoped, tag = 'output window, operand 0, single buffered']
    %11 = vsyncpa [#allocation7], 0
    %12 = vsyncpa [#allocation10], 0
    %13 = vsyncpa [#allocation13], 0
    %14 = vsyncpa [#allocation8], 0
    // Predicated region
    $region2: #{tpu_custom_call.1} parent=1 // pred_check
      _
    $region3: #{tpu_custom_call.1} parent=1 // pred_check_branch
      %16 = sbr.rel (0) target = $region5
    $region4: #{tpu_custom_call.1} parent=1 // pred_region
      %s18 = ssub.s32 1024, 1024
      %19 = vsyncadd [#allocation7], %s18
      %s20 = sshll.u32 [#allocation6], 4
      %s21 = int_to_ptr.vmem [resolvable:$true] %s20
      %26 = dma.hbm_to_vmem [thread:$0]  %s0, 1024, %s21, [#allocation7], 128, 128, 8
    $region5: #{tpu_custom_call.1} parent=1 // pred_fallthru
      _
    // Predicated region
    $region6: #{tpu_custom_call.1} parent=1 // pred_check
      _
    $region7: #{tpu_custom_call.1} parent=1 // pred_check_branch
      %28 = sbr.rel (0) target = $region9
    $region8: #{tpu_custom_call.1} parent=1 // pred_region
      %s30 = ssub.s32 1024, 1024
      %31 = vsyncadd [#allocation10], %s30
      %s32 = sshll.u32 [#allocation9], 4
      %s33 = int_to_ptr.vmem [resolvable:$true] %s32
      %38 = dma.hbm_to_vmem [thread:$0]  %s1, 1024, %s33, [#allocation10], 512, 512, 32
    $region9: #{tpu_custom_call.1} parent=1 // pred_fallthru
      _
    // Predicated region
    $region10: #{tpu_custom_call.1} parent=1 // pred_check
      _
    $region11: #{tpu_custom_call.1} parent=1 // pred_check_branch
      %40 = sbr.rel (0) target = $region13
    $region12: #{tpu_custom_call.1} parent=1 // pred_region
      %s42 = ssub.s32 8192, 8192
      %43 = vsyncadd [#allocation10], %s42
      %s44 = sshll.u32 [#allocation11], 4
      %s45 = int_to_ptr.vmem [resolvable:$true] %s44
      %50 = dma.hbm_to_vmem [thread:$0]  %s2, 8192, %s45, [#allocation10], 512, 512, 32
    $region13: #{tpu_custom_call.1} parent=1 // pred_fallthru
      _
    // Predicated region
    $region14: #{tpu_custom_call.1} parent=1 // pred_check
      _
    $region15: #{tpu_custom_call.1} parent=1 // pred_check_branch
      %52 = sbr.rel (0) target = $region17
    $region16: #{tpu_custom_call.1} parent=1 // pred_region
      _
    $region17: #{tpu_custom_call.1} parent=1 // pred_fallthru
      _
    // Predicated region
    $region18: #{tpu_custom_call.1} parent=1 // pred_check
      _
    $region19: #{tpu_custom_call.1} parent=1 // pred_check_branch
      %54 = sbr.rel (0) target = $region21
    $region20: #{tpu_custom_call.1} parent=1 // pred_region
      %s56 = ssub.s32 2048, 2048
      %57 = vsyncadd [#allocation13], %s56
      %s58 = sshll.u32 [#allocation12], 4
      %s59 = int_to_ptr.vmem [resolvable:$true] %s58
      %64 = dma.hbm_to_vmem [thread:$0]  %s4, 2048, %s59, [#allocation13], 128, 128, 8
    $region21: #{tpu_custom_call.1} parent=1 // pred_fallthru
      _
    // Predicated region
    $region22: #{tpu_custom_call.1} parent=1 // pred_check
      _
    $region23: #{tpu_custom_call.1} parent=1 // pred_check_branch
      %66 = sbr.rel (0) target = $region25
    $region24: #{tpu_custom_call.1} parent=1 // pred_region
      _
    $region25: #{tpu_custom_call.1} parent=1 // pred_fallthru
      _
    // Predicated region
    $region26: #{tpu_custom_call.1} parent=1 // pred_check
      _
    $region27: #{tpu_custom_call.1} parent=1 // pred_check_branch
      %68 = sbr.rel (0) target = $region29
    $region28: #{tpu_custom_call.1} parent=1 // pred_region
      %69 = dma.done [#allocation7], 1024
    $region29: #{tpu_custom_call.1} parent=1 // pred_fallthru
      _
    // Predicated region
    $region30: #{tpu_custom_call.1} parent=1 // pred_check
      _
    $region31: #{tpu_custom_call.1} parent=1 // pred_check_branch
      %71 = sbr.rel (0) target = $region33
    $region32: #{tpu_custom_call.1} parent=1 // pred_region
      %72 = dma.done [#allocation10], 1024
    $region33: #{tpu_custom_call.1} parent=1 // pred_fallthru
      _
    // Predicated region
    $region34: #{tpu_custom_call.1} parent=1 // pred_check
      _
    $region35: #{tpu_custom_call.1} parent=1 // pred_check_branch
      %74 = sbr.rel (0) target = $region37
    $region36: #{tpu_custom_call.1} parent=1 // pred_region
      %75 = dma.done [#allocation10], 8192
    $region37: #{tpu_custom_call.1} parent=1 // pred_fallthru
      _
    // Predicated region
    $region38: #{tpu_custom_call.1} parent=1 // pred_check
      _
    $region39: #{tpu_custom_call.1} parent=1 // pred_check_branch
      %77 = sbr.rel (0) target = $region41
    $region40: #{tpu_custom_call.1} parent=1 // pred_region
      %78 = dma.done [#allocation13], 2048
    $region41: #{tpu_custom_call.1} parent=1 // pred_fallthru
      _
    %p79 = scmp.eq.s32.totalorder 0, 0
    // Predicated region
    $region42: #{tpu_custom_call.1} parent=1 // pred_check
      %p80 = pneg %p79
    $region43: #{tpu_custom_call.1} parent=1 // pred_check_branch
      %82 = sbr.rel (%p80) target = $region45
    $region44: #{tpu_custom_call.1} parent=1 // pred_region
      %83 = vst [vmem:[#allocation3] sm:$0xff] 0.0
      %84 = vst [vmem:[#allocation4] sm:$0xff] 0.0
      %85 = vst [vmem:[#allocation5] sm:$0xff] 0.0
    $region45: #{tpu_custom_call.1} parent=1 // pred_fallthru
      _
    %v86 = vld [vmem:[#allocation6] sm:$0xff]
    %v87 = vld [vmem:[#allocation6 + $0x8] sm:$0xff]
    %v88 = vld [vmem:[#allocation6 + $0x10] sm:$0xff]
    %v89 = vld [vmem:[#allocation6 + $0x18] sm:$0xff]
    %v90 = vld [vmem:[#allocation6 + $0x20] sm:$0xff]
    %v91 = vld [vmem:[#allocation6 + $0x28] sm:$0xff]
    %v92 = vld [vmem:[#allocation6 + $0x30] sm:$0xff]
    %v93 = vld [vmem:[#allocation6 + $0x38] sm:$0xff]
    %v94 = vld [vmem:[#allocation9] sm:$0xff]
    %v95 = vld [vmem:[#allocation9 + $0x8] sm:$0xff]
    %v96 = vld [vmem:[#allocation9 + $0x10] sm:$0xff]
    %v97 = vld [vmem:[#allocation9 + $0x18] sm:$0xff]
    %v98 = vld [vmem:[#allocation9 + $0x20] sm:$0xff]
    %v99 = vld [vmem:[#allocation9 + $0x28] sm:$0xff]
    %v100 = vld [vmem:[#allocation9 + $0x30] sm:$0xff]
    %v101 = vld [vmem:[#allocation9 + $0x38] sm:$0xff]
    %v102 = vld [vmem:[%s3] sm:$0xf]
    %v104 = vlaneseq
    %v105 = vshrl.u32 %v104, 7
    %v106 = vsub.s32 0, %v105
    %v107 = vrot.slane %v102, %v106
    %v108 = vlaneseq
    %v109 = vshrl.u32 %v108, 7
    %v110 = vsub.s32 1, %v109
    %v111 = vrot.slane %v102, %v110
    %v112 = vlaneseq
    %v113 = vshrl.u32 %v112, 7
    %v114 = vsub.s32 2, %v113
    %v115 = vrot.slane %v102, %v114
    %v116 = vlaneseq
    %v117 = vshrl.u32 %v116, 7
    %v118 = vsub.s32 3, %v117
    %v119 = vrot.slane %v102, %v118
    %vm124 = vcmask 130048
    %v126 = vsel %vm124, %v86, 0
    %v129 = vsel %vm124, %v87, 0
    %v132 = vsel %vm124, %v88, 0
    %v135 = vsel %vm124, %v89, 0
    %v138 = vsel %vm124, %v90, 0
    %v141 = vsel %vm124, %v91, 0
    %v144 = vsel %vm124, %v92, 0
    %v147 = vsel %vm124, %v93, 0
    %149 = vmatprep.subr.mxu0 0.0
    %150 = vmatpush1.msra.mxu0 0.0
    %151 = vmatprep.subr.mxu0 0.0
    %152 = vmatpush1.msra.mxu0 0.0
    %153 = vmatprep.subr.mxu0 0.0
    %154 = vmatpush1.msra.mxu0 0.0
    %155 = vmatprep.subr.mxu0 0.0
    %156 = vmatpush1.msra.mxu0 0.0
    %157 = vmatprep.subr.mxu0 0.0
    %158 = vmatpush1.msra.mxu0 0.0
    %159 = vmatprep.subr.mxu0 0.0
    %160 = vmatpush1.msra.mxu0 0.0
    %161 = vmatprep.subr.mxu0 0.0
    %162 = vmatpush1.msra.mxu0 0.0
    %163 = vmatprep.subr.mxu0 0.0
    %164 = vmatpush1.msra.mxu0 0.0
    %165 = vmatprep.subr.mxu0 0.0
    %166 = vmatpush1.msra.mxu0 0.0
    %167 = vmatprep.subr.mxu0 0.0
    %168 = vmatpush1.msra.mxu0 0.0
    %169 = vmatprep.subr.mxu0 0.0
    %170 = vmatpush1.msra.mxu0 0.0
    %171 = vmatprep.subr.mxu0 0.0
    %172 = vmatpush1.msra.mxu0 0.0
    %173 = vmatprep.subr.mxu0 0.0
    %174 = vmatpush1.msra.mxu0 0.0
    %175 = vmatprep.subr.mxu0 0.0
    %176 = vmatpush1.msra.mxu0 0.0
    %177 = vmatprep.subr.mxu0 %v99
    %178 = vmatpush1.msra.mxu0 %v98
    %179 = vmatprep.subr.mxu0 %v95
    %180 = vmatpush1.msra.mxu0 %v94
    %181 = vmatprep.subr.mxu0 0.0
    %182 = vmatpush2.msra.mxu0 0.0
    %183 = vmatprep.subr.mxu0 0.0
    %184 = vmatpush2.msra.mxu0 0.0
    %185 = vmatprep.subr.mxu0 0.0
    %186 = vmatpush2.msra.mxu0 0.0
    %187 = vmatprep.subr.mxu0 0.0
    %188 = vmatpush2.msra.mxu0 0.0
    %189 = vmatprep.subr.mxu0 0.0
    %190 = vmatpush2.msra.mxu0 0.0
    %191 = vmatprep.subr.mxu0 0.0
    %192 = vmatpush2.msra.mxu0 0.0
    %193 = vmatprep.subr.mxu0 0.0
    %194 = vmatpush2.msra.mxu0 0.0
    %195 = vmatprep.subr.mxu0 0.0
    %196 = vmatpush2.msra.mxu0 0.0
    %197 = vmatprep.subr.mxu0 0.0
    %198 = vmatpush2.msra.mxu0 0.0
    %199 = vmatprep.subr.mxu0 0.0
    %200 = vmatpush2.msra.mxu0 0.0
    %201 = vmatprep.subr.mxu0 0.0
    %202 = vmatpush2.msra.mxu0 0.0
    %203 = vmatprep.subr.mxu0 0.0
    %204 = vmatpush2.msra.mxu0 0.0
    %205 = vmatprep.subr.mxu0 0.0
    %206 = vmatpush2.msra.mxu0 0.0
    %207 = vmatprep.subr.mxu0 0.0
    %208 = vmatpush2.msra.mxu0 0.0
    %209 = vmatprep.subr.mxu0 0.0
    %210 = vmatpush2.msra.mxu0 0.0
    %211 = vmatprep.subr.mxu0 0.0
    %212 = vmatpush2.msra.mxu0 0.0
    %213 = vmatprep.mubr.f32.mxu0 0.0
    %214 = vmatmul.mubr.f32.gmra.mxu0 %v126
    %v215 = vpop.f32.mrf.mxu0
    %v216 = vadd.f32 %v107, %v215
    %v217 = vpop.f32.mrf.mxu0
    %v218 = vadd.f32 %v111, %v217
    %219 = vmatprep.mubr.f32.mxu0 0.0
    %220 = vmatmul.mubr.f32.gmra.mxu0 %v129
    %v221 = vpop.f32.mrf.mxu0
    %v222 = vadd.f32 %v107, %v221
    %v223 = vpop.f32.mrf.mxu0
    %v224 = vadd.f32 %v111, %v223
    %225 = vmatprep.mubr.f32.mxu0 0.0
    %226 = vmatmul.mubr.f32.gmra.mxu0 %v132
    %v227 = vpop.f32.mrf.mxu0
    %v228 = vadd.f32 %v107, %v227
    %v229 = vpop.f32.mrf.mxu0
    %v230 = vadd.f32 %v111, %v229
    %231 = vmatprep.mubr.f32.mxu0 0.0
    %232 = vmatmul.mubr.f32.gmra.mxu0 %v135
    %v233 = vpop.f32.mrf.mxu0
    %v234 = vadd.f32 %v107, %v233
    %v235 = vpop.f32.mrf.mxu0
    %v236 = vadd.f32 %v111, %v235
    %237 = vmatprep.mubr.f32.mxu0 0.0
    %238 = vmatmul.mubr.f32.gmra.mxu0 %v138
    %v239 = vpop.f32.mrf.mxu0
    %v240 = vadd.f32 %v107, %v239
    %v241 = vpop.f32.mrf.mxu0
    %v242 = vadd.f32 %v111, %v241
    %243 = vmatprep.mubr.f32.mxu0 0.0
    %244 = vmatmul.mubr.f32.gmra.mxu0 %v141
    %v245 = vpop.f32.mrf.mxu0
    %v246 = vadd.f32 %v107, %v245
    %v247 = vpop.f32.mrf.mxu0
    %v248 = vadd.f32 %v111, %v247
    %249 = vmatprep.mubr.f32.mxu0 0.0
    %250 = vmatmul.mubr.f32.gmra.mxu0 %v144
    %v251 = vpop.f32.mrf.mxu0
    %v252 = vadd.f32 %v107, %v251
    %v253 = vpop.f32.mrf.mxu0
    %v254 = vadd.f32 %v111, %v253
    %255 = vmatprep.mubr.f32.mxu0 0.0
    %256 = vmatmul.mubr.f32.gmra.mxu0 %v147
    %v257 = vpop.f32.mrf.mxu0
    %v258 = vadd.f32 %v107, %v257
    %v259 = vpop.f32.mrf.mxu0
    %v260 = vadd.f32 %v111, %v259
    %261 = vdwg.mxu0
    %262 = vmatprep.subr.mxu0 0.0
    %263 = vmatpush1.msra.mxu0 0.0
    %264 = vmatprep.subr.mxu0 0.0
    %265 = vmatpush1.msra.mxu0 0.0
    %266 = vmatprep.subr.mxu0 0.0
    %267 = vmatpush1.msra.mxu0 0.0
    %268 = vmatprep.subr.mxu0 0.0
    %269 = vmatpush1.msra.mxu0 0.0
    %270 = vmatprep.subr.mxu0 0.0
    %271 = vmatpush1.msra.mxu0 0.0
    %272 = vmatprep.subr.mxu0 0.0
    %273 = vmatpush1.msra.mxu0 0.0
    %274 = vmatprep.subr.mxu0 0.0
    %275 = vmatpush1.msra.mxu0 0.0
    %276 = vmatprep.subr.mxu0 0.0
    %277 = vmatpush1.msra.mxu0 0.0
    %278 = vmatprep.subr.mxu0 0.0
    %279 = vmatpush1.msra.mxu0 0.0
    %280 = vmatprep.subr.mxu0 0.0
    %281 = vmatpush1.msra.mxu0 0.0
    %282 = vmatprep.subr.mxu0 0.0
    %283 = vmatpush1.msra.mxu0 0.0
    %284 = vmatprep.subr.mxu0 0.0
    %285 = vmatpush1.msra.mxu0 0.0
    %286 = vmatprep.subr.mxu0 0.0
    %287 = vmatpush1.msra.mxu0 0.0
    %288 = vmatprep.subr.mxu0 0.0
    %289 = vmatpush1.msra.mxu0 0.0
    %290 = vmatprep.subr.mxu0 %v101
    %291 = vmatpush1.msra.mxu0 %v100
    %292 = vmatprep.subr.mxu0 %v97
    %293 = vmatpush1.msra.mxu0 %v96
    %294 = vmatprep.subr.mxu0 0.0
    %295 = vmatpush2.msra.mxu0 0.0
    %296 = vmatprep.subr.mxu0 0.0
    %297 = vmatpush2.msra.mxu0 0.0
    %298 = vmatprep.subr.mxu0 0.0
    %299 = vmatpush2.msra.mxu0 0.0
    %300 = vmatprep.subr.mxu0 0.0
    %301 = vmatpush2.msra.mxu0 0.0
    %302 = vmatprep.subr.mxu0 0.0
    %303 = vmatpush2.msra.mxu0 0.0
    %304 = vmatprep.subr.mxu0 0.0
    %305 = vmatpush2.msra.mxu0 0.0
    %306 = vmatprep.subr.mxu0 0.0
    %307 = vmatpush2.msra.mxu0 0.0
    %308 = vmatprep.subr.mxu0 0.0
    %309 = vmatpush2.msra.mxu0 0.0
    %310 = vmatprep.subr.mxu0 0.0
    %311 = vmatpush2.msra.mxu0 0.0
    %312 = vmatprep.subr.mxu0 0.0
    %313 = vmatpush2.msra.mxu0 0.0
    %314 = vmatprep.subr.mxu0 0.0
    %315 = vmatpush2.msra.mxu0 0.0
    %316 = vmatprep.subr.mxu0 0.0
    %317 = vmatpush2.msra.mxu0 0.0
    %318 = vmatprep.subr.mxu0 0.0
    %319 = vmatpush2.msra.mxu0 0.0
    %320 = vmatprep.subr.mxu0 0.0
    %321 = vmatpush2.msra.mxu0 0.0
    %322 = vmatprep.subr.mxu0 0.0
    %323 = vmatpush2.msra.mxu0 0.0
    %324 = vmatprep.subr.mxu0 0.0
    %325 = vmatpush2.msra.mxu0 0.0
    %326 = vmatprep.mubr.f32.mxu0 0.0
    %327 = vmatmul.mubr.f32.gmra.mxu0 %v126
    %v328 = vpop.f32.mrf.mxu0
    %v329 = vadd.f32 %v115, %v328
    %v330 = vpop.f32.mrf.mxu0
    %v331 = vadd.f32 %v119, %v330
    %332 = vmatprep.mubr.f32.mxu0 0.0
    %333 = vmatmul.mubr.f32.gmra.mxu0 %v129
    %v334 = vpop.f32.mrf.mxu0
    %v335 = vadd.f32 %v115, %v334
    %v336 = vpop.f32.mrf.mxu0
    %v337 = vadd.f32 %v119, %v336
    %338 = vmatprep.mubr.f32.mxu0 0.0
    %339 = vmatmul.mubr.f32.gmra.mxu0 %v132
    %v340 = vpop.f32.mrf.mxu0
    %v341 = vadd.f32 %v115, %v340
    %v342 = vpop.f32.mrf.mxu0
    %v343 = vadd.f32 %v119, %v342
    %344 = vmatprep.mubr.f32.mxu0 0.0
    %345 = vmatmul.mubr.f32.gmra.mxu0 %v135
    %v346 = vpop.f32.mrf.mxu0
    %v347 = vadd.f32 %v115, %v346
    %v348 = vpop.f32.mrf.mxu0
    %v349 = vadd.f32 %v119, %v348
    %350 = vmatprep.mubr.f32.mxu0 0.0
    %351 = vmatmul.mubr.f32.gmra.mxu0 %v138
    %v352 = vpop.f32.mrf.mxu0
    %v353 = vadd.f32 %v115, %v352
    %v354 = vpop.f32.mrf.mxu0
    %v355 = vadd.f32 %v119, %v354
    %356 = vmatprep.mubr.f32.mxu0 0.0
    %357 = vmatmul.mubr.f32.gmra.mxu0 %v141
    %v358 = vpop.f32.mrf.mxu0
    %v359 = vadd.f32 %v115, %v358
    %v360 = vpop.f32.mrf.mxu0
    %v361 = vadd.f32 %v119, %v360
    %362 = vmatprep.mubr.f32.mxu0 0.0
    %363 = vmatmul.mubr.f32.gmra.mxu0 %v144
    %v364 = vpop.f32.mrf.mxu0
    %v365 = vadd.f32 %v115, %v364
    %v366 = vpop.f32.mrf.mxu0
    %v367 = vadd.f32 %v119, %v366
    %368 = vmatprep.mubr.f32.mxu0 0.0
    %369 = vmatmul.mubr.f32.gmra.mxu0 %v147
    %v370 = vpop.f32.mrf.mxu0
    %v371 = vadd.f32 %v115, %v370
    %v372 = vpop.f32.mrf.mxu0
    %v373 = vadd.f32 %v119, %v372
    %374 = vdwg.mxu0
    %375 = vst [vmem:[#allocation2] sm:$0xff] %v216
    %376 = vst [vmem:[#allocation2 + $0x8] sm:$0xff] %v218
    %377 = vst [vmem:[#allocation2 + $0x10] sm:$0xff] %v329
    %378 = vst [vmem:[#allocation2 + $0x18] sm:$0xff] %v331
    %379 = vst [vmem:[#allocation2 + $0x20] sm:$0xff] %v222
    %380 = vst [vmem:[#allocation2 + $0x28] sm:$0xff] %v224
    %381 = vst [vmem:[#allocation2 + $0x30] sm:$0xff] %v335
    %382 = vst [vmem:[#allocation2 + $0x38] sm:$0xff] %v337
    %383 = vst [vmem:[#allocation2 + $0x40] sm:$0xff] %v228
    %384 = vst [vmem:[#allocation2 + $0x48] sm:$0xff] %v230
    %385 = vst [vmem:[#allocation2 + $0x50] sm:$0xff] %v341
    %386 = vst [vmem:[#allocation2 + $0x58] sm:$0xff] %v343
    %387 = vst [vmem:[#allocation2 + $0x60] sm:$0xff] %v234
    %388 = vst [vmem:[#allocation2 + $0x68] sm:$0xff] %v236
    %389 = vst [vmem:[#allocation2 + $0x70] sm:$0xff] %v347
    %390 = vst [vmem:[#allocation2 + $0x78] sm:$0xff] %v349
    %391 = vst [vmem:[#allocation2 + $0x80] sm:$0xff] %v240
    %392 = vst [vmem:[#allocation2 + $0x88] sm:$0xff] %v242
    %393 = vst [vmem:[#allocation2 + $0x90] sm:$0xff] %v353
    %394 = vst [vmem:[#allocation2 + $0x98] sm:$0xff] %v355
    %395 = vst [vmem:[#allocation2 + $0xa0] sm:$0xff] %v246
    %396 = vst [vmem:[#allocation2 + $0xa8] sm:$0xff] %v248
    %397 = vst [vmem:[#allocation2 + $0xb0] sm:$0xff] %v359
    %398 = vst [vmem:[#allocation2 + $0xb8] sm:$0xff] %v361
    %399 = vst [vmem:[#allocation2 + $0xc0] sm:$0xff] %v252
    %400 = vst [vmem:[#allocation2 + $0xc8] sm:$0xff] %v254
    %401 = vst [vmem:[#allocation2 + $0xd0] sm:$0xff] %v365
    %402 = vst [vmem:[#allocation2 + $0xd8] sm:$0xff] %v367
    %403 = vst [vmem:[#allocation2 + $0xe0] sm:$0xff] %v258
    %404 = vst [vmem:[#allocation2 + $0xe8] sm:$0xff] %v260
    %405 = vst [vmem:[#allocation2 + $0xf0] sm:$0xff] %v371
    %406 = vst [vmem:[#allocation2 + $0xf8] sm:$0xff] %v373
    %v407 = vld [vmem:[#allocation11] sm:$0xff]
    %v408 = vld [vmem:[#allocation11 + $0x8] sm:$0xff]
    %v409 = vld [vmem:[#allocation11 + $0x10] sm:$0xff]
    %v410 = vld [vmem:[#allocation11 + $0x18] sm:$0xff]
    %v411 = vld [vmem:[#allocation11 + $0x20] sm:$0xff]
    %v412 = vld [vmem:[#allocation11 + $0x28] sm:$0xff]
    %v413 = vld [vmem:[#allocation11 + $0x30] sm:$0xff]
    %v414 = vld [vmem:[#allocation11 + $0x38] sm:$0xff]
    %v415 = vld [vmem:[#allocation11 + $0x40] sm:$0xff]
    %v416 = vld [vmem:[#allocation11 + $0x48] sm:$0xff]
    %v417 = vld [vmem:[#allocation11 + $0x50] sm:$0xff]
    %v418 = vld [vmem:[#allocation11 + $0x58] sm:$0xff]
    %v419 = vld [vmem:[#allocation11 + $0x60] sm:$0xff]
    %v420 = vld [vmem:[#allocation11 + $0x68] sm:$0xff]
    %v421 = vld [vmem:[#allocation11 + $0x70] sm:$0xff]
    %v422 = vld [vmem:[#allocation11 + $0x78] sm:$0xff]
    %v423 = vld [vmem:[#allocation11 + $0x80] sm:$0xff]
    %v424 = vld [vmem:[#allocation11 + $0x88] sm:$0xff]
    %v425 = vld [vmem:[#allocation11 + $0x90] sm:$0xff]
    %v426 = vld [vmem:[#allocation11 + $0x98] sm:$0xff]
    %v427 = vld [vmem:[#allocation11 + $0xa0] sm:$0xff]
    %v428 = vld [vmem:[#allocation11 + $0xa8] sm:$0xff]
    %v429 = vld [vmem:[#allocation11 + $0xb0] sm:$0xff]
    %v430 = vld [vmem:[#allocation11 + $0xb8] sm:$0xff]
    %v431 = vld [vmem:[#allocation11 + $0xc0] sm:$0xff]
    %v432 = vld [vmem:[#allocation11 + $0xc8] sm:$0xff]
    %v433 = vld [vmem:[#allocation11 + $0xd0] sm:$0xff]
    %v434 = vld [vmem:[#allocation11 + $0xd8] sm:$0xff]
    %v435 = vld [vmem:[#allocation11 + $0xe0] sm:$0xff]
    %v436 = vld [vmem:[#allocation11 + $0xe8] sm:$0xff]
    %v437 = vld [vmem:[#allocation11 + $0xf0] sm:$0xff]
    %v438 = vld [vmem:[#allocation11 + $0xf8] sm:$0xff]
    %v439 = vld [vmem:[#allocation11 + $0x100] sm:$0xff]
    %v440 = vld [vmem:[#allocation11 + $0x108] sm:$0xff]
    %v441 = vld [vmem:[#allocation11 + $0x110] sm:$0xff]
    %v442 = vld [vmem:[#allocation11 + $0x118] sm:$0xff]
    %v443 = vld [vmem:[#allocation11 + $0x120] sm:$0xff]
    %v444 = vld [vmem:[#allocation11 + $0x128] sm:$0xff]
    %v445 = vld [vmem:[#allocation11 + $0x130] sm:$0xff]
    %v446 = vld [vmem:[#allocation11 + $0x138] sm:$0xff]
    %v447 = vld [vmem:[#allocation11 + $0x140] sm:$0xff]
    %v448 = vld [vmem:[#allocation11 + $0x148] sm:$0xff]
    %v449 = vld [vmem:[#allocation11 + $0x150] sm:$0xff]
    %v450 = vld [vmem:[#allocation11 + $0x158] sm:$0xff]
    %v451 = vld [vmem:[#allocation11 + $0x160] sm:$0xff]
    %v452 = vld [vmem:[#allocation11 + $0x168] sm:$0xff]
    %v453 = vld [vmem:[#allocation11 + $0x170] sm:$0xff]
    %v454 = vld [vmem:[#allocation11 + $0x178] sm:$0xff]
    %v455 = vld [vmem:[#allocation11 + $0x180] sm:$0xff]
    %v456 = vld [vmem:[#allocation11 + $0x188] sm:$0xff]
    %v457 = vld [vmem:[#allocation11 + $0x190] sm:$0xff]
    %v458 = vld [vmem:[#allocation11 + $0x198] sm:$0xff]
    %v459 = vld [vmem:[#allocation11 + $0x1a0] sm:$0xff]
    %v460 = vld [vmem:[#allocation11 + $0x1a8] sm:$0xff]
    %v461 = vld [vmem:[#allocation11 + $0x1b0] sm:$0xff]
    %v462 = vld [vmem:[#allocation11 + $0x1b8] sm:$0xff]
    %v463 = vld [vmem:[#allocation11 + $0x1c0] sm:$0xff]
    %v464 = vld [vmem:[#allocation11 + $0x1c8] sm:$0xff]
    %v465 = vld [vmem:[#allocation11 + $0x1d0] sm:$0xff]
    %v466 = vld [vmem:[#allocation11 + $0x1d8] sm:$0xff]
    %v467 = vld [vmem:[#allocation11 + $0x1e0] sm:$0xff]
    %v468 = vld [vmem:[#allocation11 + $0x1e8] sm:$0xff]
    %v469 = vld [vmem:[#allocation11 + $0x1f0] sm:$0xff]
    %v470 = vld [vmem:[#allocation11 + $0x1f8] sm:$0xff]
    %v471 = vld [vmem:[#allocation3] sm:$0xff]
    %v472 = vld [vmem:[#allocation4] sm:$0xff]
    %v473 = vld [vmem:[#allocation5] sm:$0xff]
    %v474 = vld [vmem:[#allocation2] sm:$0xff]
    %v475 = vld [vmem:[#allocation2 + $0x8] sm:$0xff]
    %v476 = vld [vmem:[#allocation2 + $0x10] sm:$0xff]
    %v477 = vld [vmem:[#allocation2 + $0x18] sm:$0xff]
    %478 = vmatprep.subr.mxu0 %v468
    %479 = vmatpush1.msra.mxu0 %v467
    %480 = vmatprep.subr.mxu0 %v464
    %481 = vmatpush1.msra.mxu0 %v463
    %482 = vmatprep.subr.mxu0 %v460
    %483 = vmatpush1.msra.mxu0 %v459
    %484 = vmatprep.subr.mxu0 %v456
    %485 = vmatpush1.msra.mxu0 %v455
    %486 = vmatprep.subr.mxu0 %v452
    %487 = vmatpush1.msra.mxu0 %v451
    %488 = vmatprep.subr.mxu0 %v448
    %489 = vmatpush1.msra.mxu0 %v447
    %490 = vmatprep.subr.mxu0 %v444
    %491 = vmatpush1.msra.mxu0 %v443
    %492 = vmatprep.subr.mxu0 %v440
    %493 = vmatpush1.msra.mxu0 %v439
    %494 = vmatprep.subr.mxu0 %v436
    %495 = vmatpush1.msra.mxu0 %v435
    %496 = vmatprep.subr.mxu0 %v432
    %497 = vmatpush1.msra.mxu0 %v431
    %498 = vmatprep.subr.mxu0 %v428
    %499 = vmatpush1.msra.mxu0 %v427
    %500 = vmatprep.subr.mxu0 %v424
    %501 = vmatpush1.msra.mxu0 %v423
    %502 = vmatprep.subr.mxu0 %v420
    %503 = vmatpush1.msra.mxu0 %v419
    %504 = vmatprep.subr.mxu0 %v416
    %505 = vmatpush1.msra.mxu0 %v415
    %506 = vmatprep.subr.mxu0 %v412
    %507 = vmatpush1.msra.mxu0 %v411
    %508 = vmatprep.subr.mxu0 %v408
    %509 = vmatpush1.msra.mxu0 %v407
    %510 = vmatprep.subr.mxu0 0.0
    %511 = vmatpush2.msra.mxu0 0.0
    %512 = vmatprep.subr.mxu0 0.0
    %513 = vmatpush2.msra.mxu0 0.0
    %514 = vmatprep.subr.mxu0 0.0
    %515 = vmatpush2.msra.mxu0 0.0
    %516 = vmatprep.subr.mxu0 0.0
    %517 = vmatpush2.msra.mxu0 0.0
    %518 = vmatprep.subr.mxu0 0.0
    %519 = vmatpush2.msra.mxu0 0.0
    %520 = vmatprep.subr.mxu0 0.0
    %521 = vmatpush2.msra.mxu0 0.0
    %522 = vmatprep.subr.mxu0 0.0
    %523 = vmatpush2.msra.mxu0 0.0
    %524 = vmatprep.subr.mxu0 0.0
    %525 = vmatpush2.msra.mxu0 0.0
    %526 = vmatprep.subr.mxu0 0.0
    %527 = vmatpush2.msra.mxu0 0.0
    %528 = vmatprep.subr.mxu0 0.0
    %529 = vmatpush2.msra.mxu0 0.0
    %530 = vmatprep.subr.mxu0 0.0
    %531 = vmatpush2.msra.mxu0 0.0
    %532 = vmatprep.subr.mxu0 0.0
    %533 = vmatpush2.msra.mxu0 0.0
    %534 = vmatprep.subr.mxu0 0.0
    %535 = vmatpush2.msra.mxu0 0.0
    %536 = vmatprep.subr.mxu0 0.0
    %537 = vmatpush2.msra.mxu0 0.0
    %538 = vmatprep.subr.mxu0 0.0
    %539 = vmatpush2.msra.mxu0 0.0
    %540 = vmatprep.subr.mxu0 0.0
    %541 = vmatpush2.msra.mxu0 0.0
    %542 = vmatprep.mubr.f32.mxu0 0.0
    %543 = vmatmul.mubr.f32.gmra.mxu0 %v471
    %v544 = vpop.f32.mrf.mxu0
    %v545 = vadd.f32 0.0, %v544
    %v546 = vpop.f32.mrf.mxu0
    %v547 = vadd.f32 0.0, %v546
    %548 = vdwg.mxu0
    %549 = vmatprep.subr.mxu0 %v470
    %550 = vmatpush1.msra.mxu0 %v469
    %551 = vmatprep.subr.mxu0 %v466
    %552 = vmatpush1.msra.mxu0 %v465
    %553 = vmatprep.subr.mxu0 %v462
    %554 = vmatpush1.msra.mxu0 %v461
    %555 = vmatprep.subr.mxu0 %v458
    %556 = vmatpush1.msra.mxu0 %v457
    %557 = vmatprep.subr.mxu0 %v454
    %558 = vmatpush1.msra.mxu0 %v453
    %559 = vmatprep.subr.mxu0 %v450
    %560 = vmatpush1.msra.mxu0 %v449
    %561 = vmatprep.subr.mxu0 %v446
    %562 = vmatpush1.msra.mxu0 %v445
    %563 = vmatprep.subr.mxu0 %v442
    %564 = vmatpush1.msra.mxu0 %v441
    %565 = vmatprep.subr.mxu0 %v438
    %566 = vmatpush1.msra.mxu0 %v437
    %567 = vmatprep.subr.mxu0 %v434
    %568 = vmatpush1.msra.mxu0 %v433
    %569 = vmatprep.subr.mxu0 %v430
    %570 = vmatpush1.msra.mxu0 %v429
    %571 = vmatprep.subr.mxu0 %v426
    %572 = vmatpush1.msra.mxu0 %v425
    %573 = vmatprep.subr.mxu0 %v422
    %574 = vmatpush1.msra.mxu0 %v421
    %575 = vmatprep.subr.mxu0 %v418
    %576 = vmatpush1.msra.mxu0 %v417
    %577 = vmatprep.subr.mxu0 %v414
    %578 = vmatpush1.msra.mxu0 %v413
    %579 = vmatprep.subr.mxu0 %v410
    %580 = vmatpush1.msra.mxu0 %v409
    %581 = vmatprep.subr.mxu0 0.0
    %582 = vmatpush2.msra.mxu0 0.0
    %583 = vmatprep.subr.mxu0 0.0
    %584 = vmatpush2.msra.mxu0 0.0
    %585 = vmatprep.subr.mxu0 0.0
    %586 = vmatpush2.msra.mxu0 0.0
    %587 = vmatprep.subr.mxu0 0.0
    %588 = vmatpush2.msra.mxu0 0.0
    %589 = vmatprep.subr.mxu0 0.0
    %590 = vmatpush2.msra.mxu0 0.0
    %591 = vmatprep.subr.mxu0 0.0
    %592 = vmatpush2.msra.mxu0 0.0
    %593 = vmatprep.subr.mxu0 0.0
    %594 = vmatpush2.msra.mxu0 0.0
    %595 = vmatprep.subr.mxu0 0.0
    %596 = vmatpush2.msra.mxu0 0.0
    %597 = vmatprep.subr.mxu0 0.0
    %598 = vmatpush2.msra.mxu0 0.0
    %599 = vmatprep.subr.mxu0 0.0
    %600 = vmatpush2.msra.mxu0 0.0
    %601 = vmatprep.subr.mxu0 0.0
    %602 = vmatpush2.msra.mxu0 0.0
    %603 = vmatprep.subr.mxu0 0.0
    %604 = vmatpush2.msra.mxu0 0.0
    %605 = vmatprep.subr.mxu0 0.0
    %606 = vmatpush2.msra.mxu0 0.0
    %607 = vmatprep.subr.mxu0 0.0
    %608 = vmatpush2.msra.mxu0 0.0
    %609 = vmatprep.subr.mxu0 0.0
    %610 = vmatpush2.msra.mxu0 0.0
    %611 = vmatprep.subr.mxu0 0.0
    %612 = vmatpush2.msra.mxu0 0.0
    %613 = vmatprep.mubr.f32.mxu0 0.0
    %614 = vmatmul.mubr.f32.gmra.mxu0 %v471
    %v615 = vpop.f32.mrf.mxu0
    %v616 = vadd.f32 0.0, %v615
    %v617 = vpop.f32.mrf.mxu0
    %v618 = vadd.f32 0.0, %v617
    %619 = vdwg.mxu0
    %v620 = vadd.f32 %v474, %v545
    %v621 = vadd.f32 %v475, %v547
    %v622 = vadd.f32 %v476, %v616
    %v623 = vadd.f32 %v477, %v618
    %v624 = vxor.u32 %v620, 2147483648
    %v625 = vmul.f32 %v624, 1.442695
    %v626 = vpow.pop %v625
    %v627 = vadd.f32 %v626, 1.0
    %v628 = vrcp.pop %v627
    %v629 = vmul.f32 1.0, %v628
    %v630 = vxor.u32 %v621, 2147483648
    %v631 = vmul.f32 %v630, 1.442695
    %v632 = vpow.pop %v631
    %v633 = vadd.f32 %v632, 1.0
    %v634 = vrcp.pop %v633
    %v635 = vmul.f32 1.0, %v634
    %v636 = vtanh.pop %v622
    %v637 = vxor.u32 %v623, 2147483648
    %v638 = vmul.f32 %v637, 1.442695
    %v639 = vpow.pop %v638
    %v640 = vadd.f32 %v639, 1.0
    %v641 = vrcp.pop %v640
    %v642 = vmul.f32 1.0, %v641
    %v643 = vmul.f32 %v635, %v472
    %v644 = vmul.f32 %v629, %v636
    %v645 = vadd.f32 %v643, %v644
    %v646 = vtanh.pop %v645
    %v647 = vmul.f32 %v642, %v646
    %v648 = vadd.f32 %v473, %v647
    %s649 = scalar_lea.vmem [#allocation2], 32
    %v650 = vld [vmem:[%s649] sm:$0xff]
    %v651 = vld [vmem:[%s649 + $0x8] sm:$0xff]
    %v652 = vld [vmem:[%s649 + $0x10] sm:$0xff]
    %v653 = vld [vmem:[%s649 + $0x18] sm:$0xff]
    %654 = vmatprep.subr.mxu0 %v468
    %655 = vmatpush1.msra.mxu0 %v467
    %656 = vmatprep.subr.mxu0 %v464
    %657 = vmatpush1.msra.mxu0 %v463
    %658 = vmatprep.subr.mxu0 %v460
    %659 = vmatpush1.msra.mxu0 %v459
    %660 = vmatprep.subr.mxu0 %v456
    %661 = vmatpush1.msra.mxu0 %v455
    %662 = vmatprep.subr.mxu0 %v452
    %663 = vmatpush1.msra.mxu0 %v451
    %664 = vmatprep.subr.mxu0 %v448
    %665 = vmatpush1.msra.mxu0 %v447
    %666 = vmatprep.subr.mxu0 %v444
    %667 = vmatpush1.msra.mxu0 %v443
    %668 = vmatprep.subr.mxu0 %v440
    %669 = vmatpush1.msra.mxu0 %v439
    %670 = vmatprep.subr.mxu0 %v436
    %671 = vmatpush1.msra.mxu0 %v435
    %672 = vmatprep.subr.mxu0 %v432
    %673 = vmatpush1.msra.mxu0 %v431
    %674 = vmatprep.subr.mxu0 %v428
    %675 = vmatpush1.msra.mxu0 %v427
    %676 = vmatprep.subr.mxu0 %v424
    %677 = vmatpush1.msra.mxu0 %v423
    %678 = vmatprep.subr.mxu0 %v420
    %679 = vmatpush1.msra.mxu0 %v419
    %680 = vmatprep.subr.mxu0 %v416
    %681 = vmatpush1.msra.mxu0 %v415
    %682 = vmatprep.subr.mxu0 %v412
    %683 = vmatpush1.msra.mxu0 %v411
    %684 = vmatprep.subr.mxu0 %v408
    %685 = vmatpush1.msra.mxu0 %v407
    %686 = vmatprep.subr.mxu0 0.0
    %687 = vmatpush2.msra.mxu0 0.0
    %688 = vmatprep.subr.mxu0 0.0
    %689 = vmatpush2.msra.mxu0 0.0
    %690 = vmatprep.subr.mxu0 0.0
    %691 = vmatpush2.msra.mxu0 0.0
    %692 = vmatprep.subr.mxu0 0.0
    %693 = vmatpush2.msra.mxu0 0.0
    %694 = vmatprep.subr.mxu0 0.0
    %695 = vmatpush2.msra.mxu0 0.0
    %696 = vmatprep.subr.mxu0 0.0
    %697 = vmatpush2.msra.mxu0 0.0
    %698 = vmatprep.subr.mxu0 0.0
    %699 = vmatpush2.msra.mxu0 0.0
    %700 = vmatprep.subr.mxu0 0.0
    %701 = vmatpush2.msra.mxu0 0.0
    %702 = vmatprep.subr.mxu0 0.0
    %703 = vmatpush2.msra.mxu0 0.0
    %704 = vmatprep.subr.mxu0 0.0
    %705 = vmatpush2.msra.mxu0 0.0
    %706 = vmatprep.subr.mxu0 0.0
    %707 = vmatpush2.msra.mxu0 0.0
    %708 = vmatprep.subr.mxu0 0.0
    %709 = vmatpush2.msra.mxu0 0.0
    %710 = vmatprep.subr.mxu0 0.0
    %711 = vmatpush2.msra.mxu0 0.0
    %712 = vmatprep.subr.mxu0 0.0
    %713 = vmatpush2.msra.mxu0 0.0
    %714 = vmatprep.subr.mxu0 0.0
    %715 = vmatpush2.msra.mxu0 0.0
    %716 = vmatprep.subr.mxu0 0.0
    %717 = vmatpush2.msra.mxu0 0.0
    %718 = vmatprep.mubr.f32.mxu0 0.0
    %719 = vmatmul.mubr.f32.gmra.mxu0 %v647
    %v720 = vpop.f32.mrf.mxu0
    %v721 = vadd.f32 0.0, %v720
    %v722 = vpop.f32.mrf.mxu0
    %v723 = vadd.f32 0.0, %v722
    %724 = vdwg.mxu0
    %725 = vmatprep.subr.mxu0 %v470
    %726 = vmatpush1.msra.mxu0 %v469
    %727 = vmatprep.subr.mxu0 %v466
    %728 = vmatpush1.msra.mxu0 %v465
    %729 = vmatprep.subr.mxu0 %v462
    %730 = vmatpush1.msra.mxu0 %v461
    %731 = vmatprep.subr.mxu0 %v458
    %732 = vmatpush1.msra.mxu0 %v457
    %733 = vmatprep.subr.mxu0 %v454
    %734 = vmatpush1.msra.mxu0 %v453
    %735 = vmatprep.subr.mxu0 %v450
    %736 = vmatpush1.msra.mxu0 %v449
    %737 = vmatprep.subr.mxu0 %v446
    %738 = vmatpush1.msra.mxu0 %v445
    %739 = vmatprep.subr.mxu0 %v442
    %740 = vmatpush1.msra.mxu0 %v441
    %741 = vmatprep.subr.mxu0 %v438
    %742 = vmatpush1.msra.mxu0 %v437
    %743 = vmatprep.subr.mxu0 %v434
    %744 = vmatpush1.msra.mxu0 %v433
    %745 = vmatprep.subr.mxu0 %v430
    %746 = vmatpush1.msra.mxu0 %v429
    %747 = vmatprep.subr.mxu0 %v426
    %748 = vmatpush1.msra.mxu0 %v425
    %749 = vmatprep.subr.mxu0 %v422
    %750 = vmatpush1.msra.mxu0 %v421
    %751 = vmatprep.subr.mxu0 %v418
    %752 = vmatpush1.msra.mxu0 %v417
    %753 = vmatprep.subr.mxu0 %v414
    %754 = vmatpush1.msra.mxu0 %v413
    %755 = vmatprep.subr.mxu0 %v410
    %756 = vmatpush1.msra.mxu0 %v409
    %757 = vmatprep.subr.mxu0 0.0
    %758 = vmatpush2.msra.mxu0 0.0
    %759 = vmatprep.subr.mxu0 0.0
    %760 = vmatpush2.msra.mxu0 0.0
    %761 = vmatprep.subr.mxu0 0.0
    %762 = vmatpush2.msra.mxu0 0.0
    %763 = vmatprep.subr.mxu0 0.0
    %764 = vmatpush2.msra.mxu0 0.0
    %765 = vmatprep.subr.mxu0 0.0
    %766 = vmatpush2.msra.mxu0 0.0
    %767 = vmatprep.subr.mxu0 0.0
    %768 = vmatpush2.msra.mxu0 0.0
    %769 = vmatprep.subr.mxu0 0.0
    %770 = vmatpush2.msra.mxu0 0.0
    %771 = vmatprep.subr.mxu0 0.0
    %772 = vmatpush2.msra.mxu0 0.0
    %773 = vmatprep.subr.mxu0 0.0
    %774 = vmatpush2.msra.mxu0 0.0
    %775 = vmatprep.subr.mxu0 0.0
    %776 = vmatpush2.msra.mxu0 0.0
    %777 = vmatprep.subr.mxu0 0.0
    %778 = vmatpush2.msra.mxu0 0.0
    %779 = vmatprep.subr.mxu0 0.0
    %780 = vmatpush2.msra.mxu0 0.0
    %781 = vmatprep.subr.mxu0 0.0
    %782 = vmatpush2.msra.mxu0 0.0
    %783 = vmatprep.subr.mxu0 0.0
    %784 = vmatpush2.msra.mxu0 0.0
    %785 = vmatprep.subr.mxu0 0.0
    %786 = vmatpush2.msra.mxu0 0.0
    %787 = vmatprep.subr.mxu0 0.0
    %788 = vmatpush2.msra.mxu0 0.0
    %789 = vmatprep.mubr.f32.mxu0 0.0
    %790 = vmatmul.mubr.f32.gmra.mxu0 %v647
    %v791 = vpop.f32.mrf.mxu0
    %v792 = vadd.f32 0.0, %v791
    %v793 = vpop.f32.mrf.mxu0
    %v794 = vadd.f32 0.0, %v793
    %795 = vdwg.mxu0
    %v796 = vadd.f32 %v650, %v721
    %v797 = vadd.f32 %v651, %v723
    %v798 = vadd.f32 %v652, %v792
    %v799 = vadd.f32 %v653, %v794
    %v800 = vxor.u32 %v796, 2147483648
    %v801 = vmul.f32 %v800, 1.442695
    %v802 = vpow.pop %v801
    %v803 = vadd.f32 %v802, 1.0
    %v804 = vrcp.pop %v803
    %v805 = vmul.f32 1.0, %v804
    %v806 = vxor.u32 %v797, 2147483648
    %v807 = vmul.f32 %v806, 1.442695
    %v808 = vpow.pop %v807
    %v809 = vadd.f32 %v808, 1.0
    %v810 = vrcp.pop %v809
    %v811 = vmul.f32 1.0, %v810
    %v812 = vtanh.pop %v798
    %v813 = vxor.u32 %v799, 2147483648
    %v814 = vmul.f32 %v813, 1.442695
    %v815 = vpow.pop %v814
    %v816 = vadd.f32 %v815, 1.0
    %v817 = vrcp.pop %v816
    %v818 = vmul.f32 1.0, %v817
    %v819 = vmul.f32 %v811, %v645
    %v820 = vmul.f32 %v805, %v812
    %v821 = vadd.f32 %v819, %v820
    %v822 = vtanh.pop %v821
    %v823 = vmul.f32 %v818, %v822
    %v824 = vadd.f32 %v648, %v823
    %s825 = scalar_lea.vmem [#allocation2], 64
    %v826 = vld [vmem:[%s825] sm:$0xff]
    %v827 = vld [vmem:[%s825 + $0x8] sm:$0xff]
    %v828 = vld [vmem:[%s825 + $0x10] sm:$0xff]
    %v829 = vld [vmem:[%s825 + $0x18] sm:$0xff]
    %830 = vmatprep.subr.mxu0 %v468
    %831 = vmatpush1.msra.mxu0 %v467
    %832 = vmatprep.subr.mxu0 %v464
    %833 = vmatpush1.msra.mxu0 %v463
    %834 = vmatprep.subr.mxu0 %v460
    %835 = vmatpush1.msra.mxu0 %v459
    %836 = vmatprep.subr.mxu0 %v456
    %837 = vmatpush1.msra.mxu0 %v455
    %838 = vmatprep.subr.mxu0 %v452
    %839 = vmatpush1.msra.mxu0 %v451
    %840 = vmatprep.subr.mxu0 %v448
    %841 = vmatpush1.msra.mxu0 %v447
    %842 = vmatprep.subr.mxu0 %v444
    %843 = vmatpush1.msra.mxu0 %v443
    %844 = vmatprep.subr.mxu0 %v440
    %845 = vmatpush1.msra.mxu0 %v439
    %846 = vmatprep.subr.mxu0 %v436
    %847 = vmatpush1.msra.mxu0 %v435
    %848 = vmatprep.subr.mxu0 %v432
    %849 = vmatpush1.msra.mxu0 %v431
    %850 = vmatprep.subr.mxu0 %v428
    %851 = vmatpush1.msra.mxu0 %v427
    %852 = vmatprep.subr.mxu0 %v424
    %853 = vmatpush1.msra.mxu0 %v423
    %854 = vmatprep.subr.mxu0 %v420
    %855 = vmatpush1.msra.mxu0 %v419
    %856 = vmatprep.subr.mxu0 %v416
    %857 = vmatpush1.msra.mxu0 %v415
    %858 = vmatprep.subr.mxu0 %v412
    %859 = vmatpush1.msra.mxu0 %v411
    %860 = vmatprep.subr.mxu0 %v408
    %861 = vmatpush1.msra.mxu0 %v407
    %862 = vmatprep.subr.mxu0 0.0
    %863 = vmatpush2.msra.mxu0 0.0
    %864 = vmatprep.subr.mxu0 0.0
    %865 = vmatpush2.msra.mxu0 0.0
    %866 = vmatprep.subr.mxu0 0.0
    %867 = vmatpush2.msra.mxu0 0.0
    %868 = vmatprep.subr.mxu0 0.0
    %869 = vmatpush2.msra.mxu0 0.0
    %870 = vmatprep.subr.mxu0 0.0
    %871 = vmatpush2.msra.mxu0 0.0
    %872 = vmatprep.subr.mxu0 0.0
    %873 = vmatpush2.msra.mxu0 0.0
    %874 = vmatprep.subr.mxu0 0.0
    %875 = vmatpush2.msra.mxu0 0.0
    %876 = vmatprep.subr.mxu0 0.0
    %877 = vmatpush2.msra.mxu0 0.0
    %878 = vmatprep.subr.mxu0 0.0
    %879 = vmatpush2.msra.mxu0 0.0
    %880 = vmatprep.subr.mxu0 0.0
    %881 = vmatpush2.msra.mxu0 0.0
    %882 = vmatprep.subr.mxu0 0.0
    %883 = vmatpush2.msra.mxu0 0.0
    %884 = vmatprep.subr.mxu0 0.0
    %885 = vmatpush2.msra.mxu0 0.0
    %886 = vmatprep.subr.mxu0 0.0
    %887 = vmatpush2.msra.mxu0 0.0
    %888 = vmatprep.subr.mxu0 0.0
    %889 = vmatpush2.msra.mxu0 0.0
    %890 = vmatprep.subr.mxu0 0.0
    %891 = vmatpush2.msra.mxu0 0.0
    %892 = vmatprep.subr.mxu0 0.0
    %893 = vmatpush2.msra.mxu0 0.0
    %894 = vmatprep.mubr.f32.mxu0 0.0
    %895 = vmatmul.mubr.f32.gmra.mxu0 %v823
    %v896 = vpop.f32.mrf.mxu0
    %v897 = vadd.f32 0.0, %v896
    %v898 = vpop.f32.mrf.mxu0
    %v899 = vadd.f32 0.0, %v898
    %900 = vdwg.mxu0
    %901 = vmatprep.subr.mxu0 %v470
    %902 = vmatpush1.msra.mxu0 %v469
    %903 = vmatprep.subr.mxu0 %v466
    %904 = vmatpush1.msra.mxu0 %v465
    %905 = vmatprep.subr.mxu0 %v462
    %906 = vmatpush1.msra.mxu0 %v461
    %907 = vmatprep.subr.mxu0 %v458
    %908 = vmatpush1.msra.mxu0 %v457
    %909 = vmatprep.subr.mxu0 %v454
    %910 = vmatpush1.msra.mxu0 %v453
    %911 = vmatprep.subr.mxu0 %v450
    %912 = vmatpush1.msra.mxu0 %v449
    %913 = vmatprep.subr.mxu0 %v446
    %914 = vmatpush1.msra.mxu0 %v445
    %915 = vmatprep.subr.mxu0 %v442
    %916 = vmatpush1.msra.mxu0 %v441
    %917 = vmatprep.subr.mxu0 %v438
    %918 = vmatpush1.msra.mxu0 %v437
    %919 = vmatprep.subr.mxu0 %v434
    %920 = vmatpush1.msra.mxu0 %v433
    %921 = vmatprep.subr.mxu0 %v430
    %922 = vmatpush1.msra.mxu0 %v429
    %923 = vmatprep.subr.mxu0 %v426
    %924 = vmatpush1.msra.mxu0 %v425
    %925 = vmatprep.subr.mxu0 %v422
    %926 = vmatpush1.msra.mxu0 %v421
    %927 = vmatprep.subr.mxu0 %v418
    %928 = vmatpush1.msra.mxu0 %v417
    %929 = vmatprep.subr.mxu0 %v414
    %930 = vmatpush1.msra.mxu0 %v413
    %931 = vmatprep.subr.mxu0 %v410
    %932 = vmatpush1.msra.mxu0 %v409
    %933 = vmatprep.subr.mxu0 0.0
    %934 = vmatpush2.msra.mxu0 0.0
    %935 = vmatprep.subr.mxu0 0.0
    %936 = vmatpush2.msra.mxu0 0.0
    %937 = vmatprep.subr.mxu0 0.0
    %938 = vmatpush2.msra.mxu0 0.0
    %939 = vmatprep.subr.mxu0 0.0
    %940 = vmatpush2.msra.mxu0 0.0
    %941 = vmatprep.subr.mxu0 0.0
    %942 = vmatpush2.msra.mxu0 0.0
    %943 = vmatprep.subr.mxu0 0.0
    %944 = vmatpush2.msra.mxu0 0.0
    %945 = vmatprep.subr.mxu0 0.0
    %946 = vmatpush2.msra.mxu0 0.0
    %947 = vmatprep.subr.mxu0 0.0
    %948 = vmatpush2.msra.mxu0 0.0
    %949 = vmatprep.subr.mxu0 0.0
    %950 = vmatpush2.msra.mxu0 0.0
    %951 = vmatprep.subr.mxu0 0.0
    %952 = vmatpush2.msra.mxu0 0.0
    %953 = vmatprep.subr.mxu0 0.0
    %954 = vmatpush2.msra.mxu0 0.0
    %955 = vmatprep.subr.mxu0 0.0
    %956 = vmatpush2.msra.mxu0 0.0
    %957 = vmatprep.subr.mxu0 0.0
    %958 = vmatpush2.msra.mxu0 0.0
    %959 = vmatprep.subr.mxu0 0.0
    %960 = vmatpush2.msra.mxu0 0.0
    %961 = vmatprep.subr.mxu0 0.0
    %962 = vmatpush2.msra.mxu0 0.0
    %963 = vmatprep.subr.mxu0 0.0
    %964 = vmatpush2.msra.mxu0 0.0
    %965 = vmatprep.mubr.f32.mxu0 0.0
    %966 = vmatmul.mubr.f32.gmra.mxu0 %v823
    %v967 = vpop.f32.mrf.mxu0
    %v968 = vadd.f32 0.0, %v967
    %v969 = vpop.f32.mrf.mxu0
    %v970 = vadd.f32 0.0, %v969
    %971 = vdwg.mxu0
    %v972 = vadd.f32 %v826, %v897
    %v973 = vadd.f32 %v827, %v899
    %v974 = vadd.f32 %v828, %v968
    %v975 = vadd.f32 %v829, %v970
    %v976 = vxor.u32 %v972, 2147483648
    %v977 = vmul.f32 %v976, 1.442695
    %v978 = vpow.pop %v977
    %v979 = vadd.f32 %v978, 1.0
    %v980 = vrcp.pop %v979
    %v981 = vmul.f32 1.0, %v980
    %v982 = vxor.u32 %v973, 2147483648
    %v983 = vmul.f32 %v982, 1.442695
    %v984 = vpow.pop %v983
    %v985 = vadd.f32 %v984, 1.0
    %v986 = vrcp.pop %v985
    %v987 = vmul.f32 1.0, %v986
    %v988 = vtanh.pop %v974
    %v989 = vxor.u32 %v975, 2147483648
    %v990 = vmul.f32 %v989, 1.442695
    %v991 = vpow.pop %v990
    %v992 = vadd.f32 %v991, 1.0
    %v993 = vrcp.pop %v992
    %v994 = vmul.f32 1.0, %v993
    %v995 = vmul.f32 %v987, %v821
    %v996 = vmul.f32 %v981, %v988
    %v997 = vadd.f32 %v995, %v996
    %v998 = vtanh.pop %v997
    %v999 = vmul.f32 %v994, %v998
    %v1000 = vadd.f32 %v824, %v999
    %s1001 = scalar_lea.vmem [#allocation2], 96
    %v1002 = vld [vmem:[%s1001] sm:$0xff]
    %v1003 = vld [vmem:[%s1001 + $0x8] sm:$0xff]
    %v1004 = vld [vmem:[%s1001 + $0x10] sm:$0xff]
    %v1005 = vld [vmem:[%s1001 + $0x18] sm:$0xff]
    %1006 = vmatprep.subr.mxu0 %v468
    %1007 = vmatpush1.msra.mxu0 %v467
    %1008 = vmatprep.subr.mxu0 %v464
    %1009 = vmatpush1.msra.mxu0 %v463
    %1010 = vmatprep.subr.mxu0 %v460
    %1011 = vmatpush1.msra.mxu0 %v459
    %1012 = vmatprep.subr.mxu0 %v456
    %1013 = vmatpush1.msra.mxu0 %v455
    %1014 = vmatprep.subr.mxu0 %v452
    %1015 = vmatpush1.msra.mxu0 %v451
    %1016 = vmatprep.subr.mxu0 %v448
    %1017 = vmatpush1.msra.mxu0 %v447
    %1018 = vmatprep.subr.mxu0 %v444
    %1019 = vmatpush1.msra.mxu0 %v443
    %1020 = vmatprep.subr.mxu0 %v440
    %1021 = vmatpush1.msra.mxu0 %v439
    %1022 = vmatprep.subr.mxu0 %v436
    %1023 = vmatpush1.msra.mxu0 %v435
    %1024 = vmatprep.subr.mxu0 %v432
    %1025 = vmatpush1.msra.mxu0 %v431
    %1026 = vmatprep.subr.mxu0 %v428
    %1027 = vmatpush1.msra.mxu0 %v427
    %1028 = vmatprep.subr.mxu0 %v424
    %1029 = vmatpush1.msra.mxu0 %v423
    %1030 = vmatprep.subr.mxu0 %v420
    %1031 = vmatpush1.msra.mxu0 %v419
    %1032 = vmatprep.subr.mxu0 %v416
    %1033 = vmatpush1.msra.mxu0 %v415
    %1034 = vmatprep.subr.mxu0 %v412
    %1035 = vmatpush1.msra.mxu0 %v411
    %1036 = vmatprep.subr.mxu0 %v408
    %1037 = vmatpush1.msra.mxu0 %v407
    %1038 = vmatprep.subr.mxu0 0.0
    %1039 = vmatpush2.msra.mxu0 0.0
    %1040 = vmatprep.subr.mxu0 0.0
    %1041 = vmatpush2.msra.mxu0 0.0
    %1042 = vmatprep.subr.mxu0 0.0
    %1043 = vmatpush2.msra.mxu0 0.0
    %1044 = vmatprep.subr.mxu0 0.0
    %1045 = vmatpush2.msra.mxu0 0.0
    %1046 = vmatprep.subr.mxu0 0.0
    %1047 = vmatpush2.msra.mxu0 0.0
    %1048 = vmatprep.subr.mxu0 0.0
    %1049 = vmatpush2.msra.mxu0 0.0
    %1050 = vmatprep.subr.mxu0 0.0
    %1051 = vmatpush2.msra.mxu0 0.0
    %1052 = vmatprep.subr.mxu0 0.0
    %1053 = vmatpush2.msra.mxu0 0.0
    %1054 = vmatprep.subr.mxu0 0.0
    %1055 = vmatpush2.msra.mxu0 0.0
    %1056 = vmatprep.subr.mxu0 0.0
    %1057 = vmatpush2.msra.mxu0 0.0
    %1058 = vmatprep.subr.mxu0 0.0
    %1059 = vmatpush2.msra.mxu0 0.0
    %1060 = vmatprep.subr.mxu0 0.0
    %1061 = vmatpush2.msra.mxu0 0.0
    %1062 = vmatprep.subr.mxu0 0.0
    %1063 = vmatpush2.msra.mxu0 0.0
    %1064 = vmatprep.subr.mxu0 0.0
    %1065 = vmatpush2.msra.mxu0 0.0
    %1066 = vmatprep.subr.mxu0 0.0
    %1067 = vmatpush2.msra.mxu0 0.0
    %1068 = vmatprep.subr.mxu0 0.0
    %1069 = vmatpush2.msra.mxu0 0.0
    %1070 = vmatprep.mubr.f32.mxu0 0.0
    %1071 = vmatmul.mubr.f32.gmra.mxu0 %v999
    %v1072 = vpop.f32.mrf.mxu0
    %v1073 = vadd.f32 0.0, %v1072
    %v1074 = vpop.f32.mrf.mxu0
    %v1075 = vadd.f32 0.0, %v1074
    %1076 = vdwg.mxu0
    %1077 = vmatprep.subr.mxu0 %v470
    %1078 = vmatpush1.msra.mxu0 %v469
    %1079 = vmatprep.subr.mxu0 %v466
    %1080 = vmatpush1.msra.mxu0 %v465
    %1081 = vmatprep.subr.mxu0 %v462
    %1082 = vmatpush1.msra.mxu0 %v461
    %1083 = vmatprep.subr.mxu0 %v458
    %1084 = vmatpush1.msra.mxu0 %v457
    %1085 = vmatprep.subr.mxu0 %v454
    %1086 = vmatpush1.msra.mxu0 %v453
    %1087 = vmatprep.subr.mxu0 %v450
    %1088 = vmatpush1.msra.mxu0 %v449
    %1089 = vmatprep.subr.mxu0 %v446
    %1090 = vmatpush1.msra.mxu0 %v445
    %1091 = vmatprep.subr.mxu0 %v442
    %1092 = vmatpush1.msra.mxu0 %v441
    %1093 = vmatprep.subr.mxu0 %v438
    %1094 = vmatpush1.msra.mxu0 %v437
    %1095 = vmatprep.subr.mxu0 %v434
    %1096 = vmatpush1.msra.mxu0 %v433
    %1097 = vmatprep.subr.mxu0 %v430
    %1098 = vmatpush1.msra.mxu0 %v429
    %1099 = vmatprep.subr.mxu0 %v426
    %1100 = vmatpush1.msra.mxu0 %v425
    %1101 = vmatprep.subr.mxu0 %v422
    %1102 = vmatpush1.msra.mxu0 %v421
    %1103 = vmatprep.subr.mxu0 %v418
    %1104 = vmatpush1.msra.mxu0 %v417
    %1105 = vmatprep.subr.mxu0 %v414
    %1106 = vmatpush1.msra.mxu0 %v413
    %1107 = vmatprep.subr.mxu0 %v410
    %1108 = vmatpush1.msra.mxu0 %v409
    %1109 = vmatprep.subr.mxu0 0.0
    %1110 = vmatpush2.msra.mxu0 0.0
    %1111 = vmatprep.subr.mxu0 0.0
    %1112 = vmatpush2.msra.mxu0 0.0
    %1113 = vmatprep.subr.mxu0 0.0
    %1114 = vmatpush2.msra.mxu0 0.0
    %1115 = vmatprep.subr.mxu0 0.0
    %1116 = vmatpush2.msra.mxu0 0.0
    %1117 = vmatprep.subr.mxu0 0.0
    %1118 = vmatpush2.msra.mxu0 0.0
    %1119 = vmatprep.subr.mxu0 0.0
    %1120 = vmatpush2.msra.mxu0 0.0
    %1121 = vmatprep.subr.mxu0 0.0
    %1122 = vmatpush2.msra.mxu0 0.0
    %1123 = vmatprep.subr.mxu0 0.0
    %1124 = vmatpush2.msra.mxu0 0.0
    %1125 = vmatprep.subr.mxu0 0.0
    %1126 = vmatpush2.msra.mxu0 0.0
    %1127 = vmatprep.subr.mxu0 0.0
    %1128 = vmatpush2.msra.mxu0 0.0
    %1129 = vmatprep.subr.mxu0 0.0
    %1130 = vmatpush2.msra.mxu0 0.0
    %1131 = vmatprep.subr.mxu0 0.0
    %1132 = vmatpush2.msra.mxu0 0.0
    %1133 = vmatprep.subr.mxu0 0.0
    %1134 = vmatpush2.msra.mxu0 0.0
    %1135 = vmatprep.subr.mxu0 0.0
    %1136 = vmatpush2.msra.mxu0 0.0
    %1137 = vmatprep.subr.mxu0 0.0
    %1138 = vmatpush2.msra.mxu0 0.0
    %1139 = vmatprep.subr.mxu0 0.0
    %1140 = vmatpush2.msra.mxu0 0.0
    %1141 = vmatprep.mubr.f32.mxu0 0.0
    %1142 = vmatmul.mubr.f32.gmra.mxu0 %v999
    %v1143 = vpop.f32.mrf.mxu0
    %v1144 = vadd.f32 0.0, %v1143
    %v1145 = vpop.f32.mrf.mxu0
    %v1146 = vadd.f32 0.0, %v1145
    %1147 = vdwg.mxu0
    %v1148 = vadd.f32 %v1002, %v1073
    %v1149 = vadd.f32 %v1003, %v1075
    %v1150 = vadd.f32 %v1004, %v1144
    %v1151 = vadd.f32 %v1005, %v1146
    %v1152 = vxor.u32 %v1148, 2147483648
    %v1153 = vmul.f32 %v1152, 1.442695
    %v1154 = vpow.pop %v1153
    %v1155 = vadd.f32 %v1154, 1.0
    %v1156 = vrcp.pop %v1155
    %v1157 = vmul.f32 1.0, %v1156
    %v1158 = vxor.u32 %v1149, 2147483648
    %v1159 = vmul.f32 %v1158, 1.442695
    %v1160 = vpow.pop %v1159
    %v1161 = vadd.f32 %v1160, 1.0
    %v1162 = vrcp.pop %v1161
    %v1163 = vmul.f32 1.0, %v1162
    %v1164 = vtanh.pop %v1150
    %v1165 = vxor.u32 %v1151, 2147483648
    %v1166 = vmul.f32 %v1165, 1.442695
    %v1167 = vpow.pop %v1166
    %v1168 = vadd.f32 %v1167, 1.0
    %v1169 = vrcp.pop %v1168
    %v1170 = vmul.f32 1.0, %v1169
    %v1171 = vmul.f32 %v1163, %v997
    %v1172 = vmul.f32 %v1157, %v1164
    %v1173 = vadd.f32 %v1171, %v1172
    %v1174 = vtanh.pop %v1173
    %v1175 = vmul.f32 %v1170, %v1174
    %v1176 = vadd.f32 %v1000, %v1175
    %s1177 = scalar_lea.vmem [#allocation2], 128
    %v1178 = vld [vmem:[%s1177] sm:$0xff]
    %v1179 = vld [vmem:[%s1177 + $0x8] sm:$0xff]
    %v1180 = vld [vmem:[%s1177 + $0x10] sm:$0xff]
    %v1181 = vld [vmem:[%s1177 + $0x18] sm:$0xff]
    %1182 = vmatprep.subr.mxu0 %v468
    %1183 = vmatpush1.msra.mxu0 %v467
    %1184 = vmatprep.subr.mxu0 %v464
    %1185 = vmatpush1.msra.mxu0 %v463
    %1186 = vmatprep.subr.mxu0 %v460
    %1187 = vmatpush1.msra.mxu0 %v459
    %1188 = vmatprep.subr.mxu0 %v456
    %1189 = vmatpush1.msra.mxu0 %v455
    %1190 = vmatprep.subr.mxu0 %v452
    %1191 = vmatpush1.msra.mxu0 %v451
    %1192 = vmatprep.subr.mxu0 %v448
    %1193 = vmatpush1.msra.mxu0 %v447
    %1194 = vmatprep.subr.mxu0 %v444
    %1195 = vmatpush1.msra.mxu0 %v443
    %1196 = vmatprep.subr.mxu0 %v440
    %1197 = vmatpush1.msra.mxu0 %v439
    %1198 = vmatprep.subr.mxu0 %v436
    %1199 = vmatpush1.msra.mxu0 %v435
    %1200 = vmatprep.subr.mxu0 %v432
    %1201 = vmatpush1.msra.mxu0 %v431
    %1202 = vmatprep.subr.mxu0 %v428
    %1203 = vmatpush1.msra.mxu0 %v427
    %1204 = vmatprep.subr.mxu0 %v424
    %1205 = vmatpush1.msra.mxu0 %v423
    %1206 = vmatprep.subr.mxu0 %v420
    %1207 = vmatpush1.msra.mxu0 %v419
    %1208 = vmatprep.subr.mxu0 %v416
    %1209 = vmatpush1.msra.mxu0 %v415
    %1210 = vmatprep.subr.mxu0 %v412
    %1211 = vmatpush1.msra.mxu0 %v411
    %1212 = vmatprep.subr.mxu0 %v408
    %1213 = vmatpush1.msra.mxu0 %v407
    %1214 = vmatprep.subr.mxu0 0.0
    %1215 = vmatpush2.msra.mxu0 0.0
    %1216 = vmatprep.subr.mxu0 0.0
    %1217 = vmatpush2.msra.mxu0 0.0
    %1218 = vmatprep.subr.mxu0 0.0
    %1219 = vmatpush2.msra.mxu0 0.0
    %1220 = vmatprep.subr.mxu0 0.0
    %1221 = vmatpush2.msra.mxu0 0.0
    %1222 = vmatprep.subr.mxu0 0.0
    %1223 = vmatpush2.msra.mxu0 0.0
    %1224 = vmatprep.subr.mxu0 0.0
    %1225 = vmatpush2.msra.mxu0 0.0
    %1226 = vmatprep.subr.mxu0 0.0
    %1227 = vmatpush2.msra.mxu0 0.0
    %1228 = vmatprep.subr.mxu0 0.0
    %1229 = vmatpush2.msra.mxu0 0.0
    %1230 = vmatprep.subr.mxu0 0.0
    %1231 = vmatpush2.msra.mxu0 0.0
    %1232 = vmatprep.subr.mxu0 0.0
    %1233 = vmatpush2.msra.mxu0 0.0
    %1234 = vmatprep.subr.mxu0 0.0
    %1235 = vmatpush2.msra.mxu0 0.0
    %1236 = vmatprep.subr.mxu0 0.0
    %1237 = vmatpush2.msra.mxu0 0.0
    %1238 = vmatprep.subr.mxu0 0.0
    %1239 = vmatpush2.msra.mxu0 0.0
    %1240 = vmatprep.subr.mxu0 0.0
    %1241 = vmatpush2.msra.mxu0 0.0
    %1242 = vmatprep.subr.mxu0 0.0
    %1243 = vmatpush2.msra.mxu0 0.0
    %1244 = vmatprep.subr.mxu0 0.0
    %1245 = vmatpush2.msra.mxu0 0.0
    %1246 = vmatprep.mubr.f32.mxu0 0.0
    %1247 = vmatmul.mubr.f32.gmra.mxu0 %v1175
    %v1248 = vpop.f32.mrf.mxu0
    %v1249 = vadd.f32 0.0, %v1248
    %v1250 = vpop.f32.mrf.mxu0
    %v1251 = vadd.f32 0.0, %v1250
    %1252 = vdwg.mxu0
    %1253 = vmatprep.subr.mxu0 %v470
    %1254 = vmatpush1.msra.mxu0 %v469
    %1255 = vmatprep.subr.mxu0 %v466
    %1256 = vmatpush1.msra.mxu0 %v465
    %1257 = vmatprep.subr.mxu0 %v462
    %1258 = vmatpush1.msra.mxu0 %v461
    %1259 = vmatprep.subr.mxu0 %v458
    %1260 = vmatpush1.msra.mxu0 %v457
    %1261 = vmatprep.subr.mxu0 %v454
    %1262 = vmatpush1.msra.mxu0 %v453
    %1263 = vmatprep.subr.mxu0 %v450
    %1264 = vmatpush1.msra.mxu0 %v449
    %1265 = vmatprep.subr.mxu0 %v446
    %1266 = vmatpush1.msra.mxu0 %v445
    %1267 = vmatprep.subr.mxu0 %v442
    %1268 = vmatpush1.msra.mxu0 %v441
    %1269 = vmatprep.subr.mxu0 %v438
    %1270 = vmatpush1.msra.mxu0 %v437
    %1271 = vmatprep.subr.mxu0 %v434
    %1272 = vmatpush1.msra.mxu0 %v433
    %1273 = vmatprep.subr.mxu0 %v430
    %1274 = vmatpush1.msra.mxu0 %v429
    %1275 = vmatprep.subr.mxu0 %v426
    %1276 = vmatpush1.msra.mxu0 %v425
    %1277 = vmatprep.subr.mxu0 %v422
    %1278 = vmatpush1.msra.mxu0 %v421
    %1279 = vmatprep.subr.mxu0 %v418
    %1280 = vmatpush1.msra.mxu0 %v417
    %1281 = vmatprep.subr.mxu0 %v414
    %1282 = vmatpush1.msra.mxu0 %v413
    %1283 = vmatprep.subr.mxu0 %v410
    %1284 = vmatpush1.msra.mxu0 %v409
    %1285 = vmatprep.subr.mxu0 0.0
    %1286 = vmatpush2.msra.mxu0 0.0
    %1287 = vmatprep.subr.mxu0 0.0
    %1288 = vmatpush2.msra.mxu0 0.0
    %1289 = vmatprep.subr.mxu0 0.0
    %1290 = vmatpush2.msra.mxu0 0.0
    %1291 = vmatprep.subr.mxu0 0.0
    %1292 = vmatpush2.msra.mxu0 0.0
    %1293 = vmatprep.subr.mxu0 0.0
    %1294 = vmatpush2.msra.mxu0 0.0
    %1295 = vmatprep.subr.mxu0 0.0
    %1296 = vmatpush2.msra.mxu0 0.0
    %1297 = vmatprep.subr.mxu0 0.0
    %1298 = vmatpush2.msra.mxu0 0.0
    %1299 = vmatprep.subr.mxu0 0.0
    %1300 = vmatpush2.msra.mxu0 0.0
    %1301 = vmatprep.subr.mxu0 0.0
    %1302 = vmatpush2.msra.mxu0 0.0
    %1303 = vmatprep.subr.mxu0 0.0
    %1304 = vmatpush2.msra.mxu0 0.0
    %1305 = vmatprep.subr.mxu0 0.0
    %1306 = vmatpush2.msra.mxu0 0.0
    %1307 = vmatprep.subr.mxu0 0.0
    %1308 = vmatpush2.msra.mxu0 0.0
    %1309 = vmatprep.subr.mxu0 0.0
    %1310 = vmatpush2.msra.mxu0 0.0
    %1311 = vmatprep.subr.mxu0 0.0
    %1312 = vmatpush2.msra.mxu0 0.0
    %1313 = vmatprep.subr.mxu0 0.0
    %1314 = vmatpush2.msra.mxu0 0.0
    %1315 = vmatprep.subr.mxu0 0.0
    %1316 = vmatpush2.msra.mxu0 0.0
    %1317 = vmatprep.mubr.f32.mxu0 0.0
    %1318 = vmatmul.mubr.f32.gmra.mxu0 %v1175
    %v1319 = vpop.f32.mrf.mxu0
    %v1320 = vadd.f32 0.0, %v1319
    %v1321 = vpop.f32.mrf.mxu0
    %v1322 = vadd.f32 0.0, %v1321
    %1323 = vdwg.mxu0
    %v1324 = vadd.f32 %v1178, %v1249
    %v1325 = vadd.f32 %v1179, %v1251
    %v1326 = vadd.f32 %v1180, %v1320
    %v1327 = vadd.f32 %v1181, %v1322
    %v1328 = vxor.u32 %v1324, 2147483648
    %v1329 = vmul.f32 %v1328, 1.442695
    %v1330 = vpow.pop %v1329
    %v1331 = vadd.f32 %v1330, 1.0
    %v1332 = vrcp.pop %v1331
    %v1333 = vmul.f32 1.0, %v1332
    %v1334 = vxor.u32 %v1325, 2147483648
    %v1335 = vmul.f32 %v1334, 1.442695
    %v1336 = vpow.pop %v1335
    %v1337 = vadd.f32 %v1336, 1.0
    %v1338 = vrcp.pop %v1337
    %v1339 = vmul.f32 1.0, %v1338
    %v1340 = vtanh.pop %v1326
    %v1341 = vxor.u32 %v1327, 2147483648
    %v1342 = vmul.f32 %v1341, 1.442695
    %v1343 = vpow.pop %v1342
    %v1344 = vadd.f32 %v1343, 1.0
    %v1345 = vrcp.pop %v1344
    %v1346 = vmul.f32 1.0, %v1345
    %v1347 = vmul.f32 %v1339, %v1173
    %v1348 = vmul.f32 %v1333, %v1340
    %v1349 = vadd.f32 %v1347, %v1348
    %v1350 = vtanh.pop %v1349
    %v1351 = vmul.f32 %v1346, %v1350
    %v1352 = vadd.f32 %v1176, %v1351
    %s1353 = scalar_lea.vmem [#allocation2], 160
    %v1354 = vld [vmem:[%s1353] sm:$0xff]
    %v1355 = vld [vmem:[%s1353 + $0x8] sm:$0xff]
    %v1356 = vld [vmem:[%s1353 + $0x10] sm:$0xff]
    %v1357 = vld [vmem:[%s1353 + $0x18] sm:$0xff]
    %1358 = vmatprep.subr.mxu0 %v468
    %1359 = vmatpush1.msra.mxu0 %v467
    %1360 = vmatprep.subr.mxu0 %v464
    %1361 = vmatpush1.msra.mxu0 %v463
    %1362 = vmatprep.subr.mxu0 %v460
    %1363 = vmatpush1.msra.mxu0 %v459
    %1364 = vmatprep.subr.mxu0 %v456
    %1365 = vmatpush1.msra.mxu0 %v455
    %1366 = vmatprep.subr.mxu0 %v452
    %1367 = vmatpush1.msra.mxu0 %v451
    %1368 = vmatprep.subr.mxu0 %v448
    %1369 = vmatpush1.msra.mxu0 %v447
    %1370 = vmatprep.subr.mxu0 %v444
    %1371 = vmatpush1.msra.mxu0 %v443
    %1372 = vmatprep.subr.mxu0 %v440
    %1373 = vmatpush1.msra.mxu0 %v439
    %1374 = vmatprep.subr.mxu0 %v436
    %1375 = vmatpush1.msra.mxu0 %v435
    %1376 = vmatprep.subr.mxu0 %v432
    %1377 = vmatpush1.msra.mxu0 %v431
    %1378 = vmatprep.subr.mxu0 %v428
    %1379 = vmatpush1.msra.mxu0 %v427
    %1380 = vmatprep.subr.mxu0 %v424
    %1381 = vmatpush1.msra.mxu0 %v423
    %1382 = vmatprep.subr.mxu0 %v420
    %1383 = vmatpush1.msra.mxu0 %v419
    %1384 = vmatprep.subr.mxu0 %v416
    %1385 = vmatpush1.msra.mxu0 %v415
    %1386 = vmatprep.subr.mxu0 %v412
    %1387 = vmatpush1.msra.mxu0 %v411
    %1388 = vmatprep.subr.mxu0 %v408
    %1389 = vmatpush1.msra.mxu0 %v407
    %1390 = vmatprep.subr.mxu0 0.0
    %1391 = vmatpush2.msra.mxu0 0.0
    %1392 = vmatprep.subr.mxu0 0.0
    %1393 = vmatpush2.msra.mxu0 0.0
    %1394 = vmatprep.subr.mxu0 0.0
    %1395 = vmatpush2.msra.mxu0 0.0
    %1396 = vmatprep.subr.mxu0 0.0
    %1397 = vmatpush2.msra.mxu0 0.0
    %1398 = vmatprep.subr.mxu0 0.0
    %1399 = vmatpush2.msra.mxu0 0.0
    %1400 = vmatprep.subr.mxu0 0.0
    %1401 = vmatpush2.msra.mxu0 0.0
    %1402 = vmatprep.subr.mxu0 0.0
    %1403 = vmatpush2.msra.mxu0 0.0
    %1404 = vmatprep.subr.mxu0 0.0
    %1405 = vmatpush2.msra.mxu0 0.0
    %1406 = vmatprep.subr.mxu0 0.0
    %1407 = vmatpush2.msra.mxu0 0.0
    %1408 = vmatprep.subr.mxu0 0.0
    %1409 = vmatpush2.msra.mxu0 0.0
    %1410 = vmatprep.subr.mxu0 0.0
    %1411 = vmatpush2.msra.mxu0 0.0
    %1412 = vmatprep.subr.mxu0 0.0
    %1413 = vmatpush2.msra.mxu0 0.0
    %1414 = vmatprep.subr.mxu0 0.0
    %1415 = vmatpush2.msra.mxu0 0.0
    %1416 = vmatprep.subr.mxu0 0.0
    %1417 = vmatpush2.msra.mxu0 0.0
    %1418 = vmatprep.subr.mxu0 0.0
    %1419 = vmatpush2.msra.mxu0 0.0
    %1420 = vmatprep.subr.mxu0 0.0
    %1421 = vmatpush2.msra.mxu0 0.0
    %1422 = vmatprep.mubr.f32.mxu0 0.0
    %1423 = vmatmul.mubr.f32.gmra.mxu0 %v1351
    %v1424 = vpop.f32.mrf.mxu0
    %v1425 = vadd.f32 0.0, %v1424
    %v1426 = vpop.f32.mrf.mxu0
    %v1427 = vadd.f32 0.0, %v1426
    %1428 = vdwg.mxu0
    %1429 = vmatprep.subr.mxu0 %v470
    %1430 = vmatpush1.msra.mxu0 %v469
    %1431 = vmatprep.subr.mxu0 %v466
    %1432 = vmatpush1.msra.mxu0 %v465
    %1433 = vmatprep.subr.mxu0 %v462
    %1434 = vmatpush1.msra.mxu0 %v461
    %1435 = vmatprep.subr.mxu0 %v458
    %1436 = vmatpush1.msra.mxu0 %v457
    %1437 = vmatprep.subr.mxu0 %v454
    %1438 = vmatpush1.msra.mxu0 %v453
    %1439 = vmatprep.subr.mxu0 %v450
    %1440 = vmatpush1.msra.mxu0 %v449
    %1441 = vmatprep.subr.mxu0 %v446
    %1442 = vmatpush1.msra.mxu0 %v445
    %1443 = vmatprep.subr.mxu0 %v442
    %1444 = vmatpush1.msra.mxu0 %v441
    %1445 = vmatprep.subr.mxu0 %v438
    %1446 = vmatpush1.msra.mxu0 %v437
    %1447 = vmatprep.subr.mxu0 %v434
    %1448 = vmatpush1.msra.mxu0 %v433
    %1449 = vmatprep.subr.mxu0 %v430
    %1450 = vmatpush1.msra.mxu0 %v429
    %1451 = vmatprep.subr.mxu0 %v426
    %1452 = vmatpush1.msra.mxu0 %v425
    %1453 = vmatprep.subr.mxu0 %v422
    %1454 = vmatpush1.msra.mxu0 %v421
    %1455 = vmatprep.subr.mxu0 %v418
    %1456 = vmatpush1.msra.mxu0 %v417
    %1457 = vmatprep.subr.mxu0 %v414
    %1458 = vmatpush1.msra.mxu0 %v413
    %1459 = vmatprep.subr.mxu0 %v410
    %1460 = vmatpush1.msra.mxu0 %v409
    %1461 = vmatprep.subr.mxu0 0.0
    %1462 = vmatpush2.msra.mxu0 0.0
    %1463 = vmatprep.subr.mxu0 0.0
    %1464 = vmatpush2.msra.mxu0 0.0
    %1465 = vmatprep.subr.mxu0 0.0
    %1466 = vmatpush2.msra.mxu0 0.0
    %1467 = vmatprep.subr.mxu0 0.0
    %1468 = vmatpush2.msra.mxu0 0.0
    %1469 = vmatprep.subr.mxu0 0.0
    %1470 = vmatpush2.msra.mxu0 0.0
    %1471 = vmatprep.subr.mxu0 0.0
    %1472 = vmatpush2.msra.mxu0 0.0
    %1473 = vmatprep.subr.mxu0 0.0
    %1474 = vmatpush2.msra.mxu0 0.0
    %1475 = vmatprep.subr.mxu0 0.0
    %1476 = vmatpush2.msra.mxu0 0.0
    %1477 = vmatprep.subr.mxu0 0.0
    %1478 = vmatpush2.msra.mxu0 0.0
    %1479 = vmatprep.subr.mxu0 0.0
    %1480 = vmatpush2.msra.mxu0 0.0
    %1481 = vmatprep.subr.mxu0 0.0
    %1482 = vmatpush2.msra.mxu0 0.0
    %1483 = vmatprep.subr.mxu0 0.0
    %1484 = vmatpush2.msra.mxu0 0.0
    %1485 = vmatprep.subr.mxu0 0.0
    %1486 = vmatpush2.msra.mxu0 0.0
    %1487 = vmatprep.subr.mxu0 0.0
    %1488 = vmatpush2.msra.mxu0 0.0
    %1489 = vmatprep.subr.mxu0 0.0
    %1490 = vmatpush2.msra.mxu0 0.0
    %1491 = vmatprep.subr.mxu0 0.0
    %1492 = vmatpush2.msra.mxu0 0.0
    %1493 = vmatprep.mubr.f32.mxu0 0.0
    %1494 = vmatmul.mubr.f32.gmra.mxu0 %v1351
    %v1495 = vpop.f32.mrf.mxu0
    %v1496 = vadd.f32 0.0, %v1495
    %v1497 = vpop.f32.mrf.mxu0
    %v1498 = vadd.f32 0.0, %v1497
    %1499 = vdwg.mxu0
    %v1500 = vadd.f32 %v1354, %v1425
    %v1501 = vadd.f32 %v1355, %v1427
    %v1502 = vadd.f32 %v1356, %v1496
    %v1503 = vadd.f32 %v1357, %v1498
    %v1504 = vxor.u32 %v1500, 2147483648
    %v1505 = vmul.f32 %v1504, 1.442695
    %v1506 = vpow.pop %v1505
    %v1507 = vadd.f32 %v1506, 1.0
    %v1508 = vrcp.pop %v1507
    %v1509 = vmul.f32 1.0, %v1508
    %v1510 = vxor.u32 %v1501, 2147483648
    %v1511 = vmul.f32 %v1510, 1.442695
    %v1512 = vpow.pop %v1511
    %v1513 = vadd.f32 %v1512, 1.0
    %v1514 = vrcp.pop %v1513
    %v1515 = vmul.f32 1.0, %v1514
    %v1516 = vtanh.pop %v1502
    %v1517 = vxor.u32 %v1503, 2147483648
    %v1518 = vmul.f32 %v1517, 1.442695
    %v1519 = vpow.pop %v1518
    %v1520 = vadd.f32 %v1519, 1.0
    %v1521 = vrcp.pop %v1520
    %v1522 = vmul.f32 1.0, %v1521
    %v1523 = vmul.f32 %v1515, %v1349
    %v1524 = vmul.f32 %v1509, %v1516
    %v1525 = vadd.f32 %v1523, %v1524
    %v1526 = vtanh.pop %v1525
    %v1527 = vmul.f32 %v1522, %v1526
    %v1528 = vadd.f32 %v1352, %v1527
    %s1529 = scalar_lea.vmem [#allocation2], 192
    %v1530 = vld [vmem:[%s1529] sm:$0xff]
    %v1531 = vld [vmem:[%s1529 + $0x8] sm:$0xff]
    %v1532 = vld [vmem:[%s1529 + $0x10] sm:$0xff]
    %v1533 = vld [vmem:[%s1529 + $0x18] sm:$0xff]
    %1534 = vmatprep.subr.mxu0 %v468
    %1535 = vmatpush1.msra.mxu0 %v467
    %1536 = vmatprep.subr.mxu0 %v464
    %1537 = vmatpush1.msra.mxu0 %v463
    %1538 = vmatprep.subr.mxu0 %v460
    %1539 = vmatpush1.msra.mxu0 %v459
    %1540 = vmatprep.subr.mxu0 %v456
    %1541 = vmatpush1.msra.mxu0 %v455
    %1542 = vmatprep.subr.mxu0 %v452
    %1543 = vmatpush1.msra.mxu0 %v451
    %1544 = vmatprep.subr.mxu0 %v448
    %1545 = vmatpush1.msra.mxu0 %v447
    %1546 = vmatprep.subr.mxu0 %v444
    %1547 = vmatpush1.msra.mxu0 %v443
    %1548 = vmatprep.subr.mxu0 %v440
    %1549 = vmatpush1.msra.mxu0 %v439
    %1550 = vmatprep.subr.mxu0 %v436
    %1551 = vmatpush1.msra.mxu0 %v435
    %1552 = vmatprep.subr.mxu0 %v432
    %1553 = vmatpush1.msra.mxu0 %v431
    %1554 = vmatprep.subr.mxu0 %v428
    %1555 = vmatpush1.msra.mxu0 %v427
    %1556 = vmatprep.subr.mxu0 %v424
    %1557 = vmatpush1.msra.mxu0 %v423
    %1558 = vmatprep.subr.mxu0 %v420
    %1559 = vmatpush1.msra.mxu0 %v419
    %1560 = vmatprep.subr.mxu0 %v416
    %1561 = vmatpush1.msra.mxu0 %v415
    %1562 = vmatprep.subr.mxu0 %v412
    %1563 = vmatpush1.msra.mxu0 %v411
    %1564 = vmatprep.subr.mxu0 %v408
    %1565 = vmatpush1.msra.mxu0 %v407
    %1566 = vmatprep.subr.mxu0 0.0
    %1567 = vmatpush2.msra.mxu0 0.0
    %1568 = vmatprep.subr.mxu0 0.0
    %1569 = vmatpush2.msra.mxu0 0.0
    %1570 = vmatprep.subr.mxu0 0.0
    %1571 = vmatpush2.msra.mxu0 0.0
    %1572 = vmatprep.subr.mxu0 0.0
    %1573 = vmatpush2.msra.mxu0 0.0
    %1574 = vmatprep.subr.mxu0 0.0
    %1575 = vmatpush2.msra.mxu0 0.0
    %1576 = vmatprep.subr.mxu0 0.0
    %1577 = vmatpush2.msra.mxu0 0.0
    %1578 = vmatprep.subr.mxu0 0.0
    %1579 = vmatpush2.msra.mxu0 0.0
    %1580 = vmatprep.subr.mxu0 0.0
    %1581 = vmatpush2.msra.mxu0 0.0
    %1582 = vmatprep.subr.mxu0 0.0
    %1583 = vmatpush2.msra.mxu0 0.0
    %1584 = vmatprep.subr.mxu0 0.0
    %1585 = vmatpush2.msra.mxu0 0.0
    %1586 = vmatprep.subr.mxu0 0.0
    %1587 = vmatpush2.msra.mxu0 0.0
    %1588 = vmatprep.subr.mxu0 0.0
    %1589 = vmatpush2.msra.mxu0 0.0
    %1590 = vmatprep.subr.mxu0 0.0
    %1591 = vmatpush2.msra.mxu0 0.0
    %1592 = vmatprep.subr.mxu0 0.0
    %1593 = vmatpush2.msra.mxu0 0.0
    %1594 = vmatprep.subr.mxu0 0.0
    %1595 = vmatpush2.msra.mxu0 0.0
    %1596 = vmatprep.subr.mxu0 0.0
    %1597 = vmatpush2.msra.mxu0 0.0
    %1598 = vmatprep.mubr.f32.mxu0 0.0
    %1599 = vmatmul.mubr.f32.gmra.mxu0 %v1527
    %v1600 = vpop.f32.mrf.mxu0
    %v1601 = vadd.f32 0.0, %v1600
    %v1602 = vpop.f32.mrf.mxu0
    %v1603 = vadd.f32 0.0, %v1602
    %1604 = vdwg.mxu0
    %1605 = vmatprep.subr.mxu0 %v470
    %1606 = vmatpush1.msra.mxu0 %v469
    %1607 = vmatprep.subr.mxu0 %v466
    %1608 = vmatpush1.msra.mxu0 %v465
    %1609 = vmatprep.subr.mxu0 %v462
    %1610 = vmatpush1.msra.mxu0 %v461
    %1611 = vmatprep.subr.mxu0 %v458
    %1612 = vmatpush1.msra.mxu0 %v457
    %1613 = vmatprep.subr.mxu0 %v454
    %1614 = vmatpush1.msra.mxu0 %v453
    %1615 = vmatprep.subr.mxu0 %v450
    %1616 = vmatpush1.msra.mxu0 %v449
    %1617 = vmatprep.subr.mxu0 %v446
    %1618 = vmatpush1.msra.mxu0 %v445
    %1619 = vmatprep.subr.mxu0 %v442
    %1620 = vmatpush1.msra.mxu0 %v441
    %1621 = vmatprep.subr.mxu0 %v438
    %1622 = vmatpush1.msra.mxu0 %v437
    %1623 = vmatprep.subr.mxu0 %v434
    %1624 = vmatpush1.msra.mxu0 %v433
    %1625 = vmatprep.subr.mxu0 %v430
    %1626 = vmatpush1.msra.mxu0 %v429
    %1627 = vmatprep.subr.mxu0 %v426
    %1628 = vmatpush1.msra.mxu0 %v425
    %1629 = vmatprep.subr.mxu0 %v422
    %1630 = vmatpush1.msra.mxu0 %v421
    %1631 = vmatprep.subr.mxu0 %v418
    %1632 = vmatpush1.msra.mxu0 %v417
    %1633 = vmatprep.subr.mxu0 %v414
    %1634 = vmatpush1.msra.mxu0 %v413
    %1635 = vmatprep.subr.mxu0 %v410
    %1636 = vmatpush1.msra.mxu0 %v409
    %1637 = vmatprep.subr.mxu0 0.0
    %1638 = vmatpush2.msra.mxu0 0.0
    %1639 = vmatprep.subr.mxu0 0.0
    %1640 = vmatpush2.msra.mxu0 0.0
    %1641 = vmatprep.subr.mxu0 0.0
    %1642 = vmatpush2.msra.mxu0 0.0
    %1643 = vmatprep.subr.mxu0 0.0
    %1644 = vmatpush2.msra.mxu0 0.0
    %1645 = vmatprep.subr.mxu0 0.0
    %1646 = vmatpush2.msra.mxu0 0.0
    %1647 = vmatprep.subr.mxu0 0.0
    %1648 = vmatpush2.msra.mxu0 0.0
    %1649 = vmatprep.subr.mxu0 0.0
    %1650 = vmatpush2.msra.mxu0 0.0
    %1651 = vmatprep.subr.mxu0 0.0
    %1652 = vmatpush2.msra.mxu0 0.0
    %1653 = vmatprep.subr.mxu0 0.0
    %1654 = vmatpush2.msra.mxu0 0.0
    %1655 = vmatprep.subr.mxu0 0.0
    %1656 = vmatpush2.msra.mxu0 0.0
    %1657 = vmatprep.subr.mxu0 0.0
    %1658 = vmatpush2.msra.mxu0 0.0
    %1659 = vmatprep.subr.mxu0 0.0
    %1660 = vmatpush2.msra.mxu0 0.0
    %1661 = vmatprep.subr.mxu0 0.0
    %1662 = vmatpush2.msra.mxu0 0.0
    %1663 = vmatprep.subr.mxu0 0.0
    %1664 = vmatpush2.msra.mxu0 0.0
    %1665 = vmatprep.subr.mxu0 0.0
    %1666 = vmatpush2.msra.mxu0 0.0
    %1667 = vmatprep.subr.mxu0 0.0
    %1668 = vmatpush2.msra.mxu0 0.0
    %1669 = vmatprep.mubr.f32.mxu0 0.0
    %1670 = vmatmul.mubr.f32.gmra.mxu0 %v1527
    %v1671 = vpop.f32.mrf.mxu0
    %v1672 = vadd.f32 0.0, %v1671
    %v1673 = vpop.f32.mrf.mxu0
    %v1674 = vadd.f32 0.0, %v1673
    %1675 = vdwg.mxu0
    %v1676 = vadd.f32 %v1530, %v1601
    %v1677 = vadd.f32 %v1531, %v1603
    %v1678 = vadd.f32 %v1532, %v1672
    %v1679 = vadd.f32 %v1533, %v1674
    %v1680 = vxor.u32 %v1676, 2147483648
    %v1681 = vmul.f32 %v1680, 1.442695
    %v1682 = vpow.pop %v1681
    %v1683 = vadd.f32 %v1682, 1.0
    %v1684 = vrcp.pop %v1683
    %v1685 = vmul.f32 1.0, %v1684
    %v1686 = vxor.u32 %v1677, 2147483648
    %v1687 = vmul.f32 %v1686, 1.442695
    %v1688 = vpow.pop %v1687
    %v1689 = vadd.f32 %v1688, 1.0
    %v1690 = vrcp.pop %v1689
    %v1691 = vmul.f32 1.0, %v1690
    %v1692 = vtanh.pop %v1678
    %v1693 = vxor.u32 %v1679, 2147483648
    %v1694 = vmul.f32 %v1693, 1.442695
    %v1695 = vpow.pop %v1694
    %v1696 = vadd.f32 %v1695, 1.0
    %v1697 = vrcp.pop %v1696
    %v1698 = vmul.f32 1.0, %v1697
    %v1699 = vmul.f32 %v1691, %v1525
    %v1700 = vmul.f32 %v1685, %v1692
    %v1701 = vadd.f32 %v1699, %v1700
    %v1702 = vtanh.pop %v1701
    %v1703 = vmul.f32 %v1698, %v1702
    %v1704 = vadd.f32 %v1528, %v1703
    %s1705 = scalar_lea.vmem [#allocation2], 224
    %v1706 = vld [vmem:[%s1705] sm:$0xff]
    %v1707 = vld [vmem:[%s1705 + $0x8] sm:$0xff]
    %v1708 = vld [vmem:[%s1705 + $0x10] sm:$0xff]
    %v1709 = vld [vmem:[%s1705 + $0x18] sm:$0xff]
    %1710 = vmatprep.subr.mxu0 %v468
    %1711 = vmatpush1.msra.mxu0 %v467
    %1712 = vmatprep.subr.mxu0 %v464
    %1713 = vmatpush1.msra.mxu0 %v463
    %1714 = vmatprep.subr.mxu0 %v460
    %1715 = vmatpush1.msra.mxu0 %v459
    %1716 = vmatprep.subr.mxu0 %v456
    %1717 = vmatpush1.msra.mxu0 %v455
    %1718 = vmatprep.subr.mxu0 %v452
    %1719 = vmatpush1.msra.mxu0 %v451
    %1720 = vmatprep.subr.mxu0 %v448
    %1721 = vmatpush1.msra.mxu0 %v447
    %1722 = vmatprep.subr.mxu0 %v444
    %1723 = vmatpush1.msra.mxu0 %v443
    %1724 = vmatprep.subr.mxu0 %v440
    %1725 = vmatpush1.msra.mxu0 %v439
    %1726 = vmatprep.subr.mxu0 %v436
    %1727 = vmatpush1.msra.mxu0 %v435
    %1728 = vmatprep.subr.mxu0 %v432
    %1729 = vmatpush1.msra.mxu0 %v431
    %1730 = vmatprep.subr.mxu0 %v428
    %1731 = vmatpush1.msra.mxu0 %v427
    %1732 = vmatprep.subr.mxu0 %v424
    %1733 = vmatpush1.msra.mxu0 %v423
    %1734 = vmatprep.subr.mxu0 %v420
    %1735 = vmatpush1.msra.mxu0 %v419
    %1736 = vmatprep.subr.mxu0 %v416
    %1737 = vmatpush1.msra.mxu0 %v415
    %1738 = vmatprep.subr.mxu0 %v412
    %1739 = vmatpush1.msra.mxu0 %v411
    %1740 = vmatprep.subr.mxu0 %v408
    %1741 = vmatpush1.msra.mxu0 %v407
    %1742 = vmatprep.subr.mxu0 0.0
    %1743 = vmatpush2.msra.mxu0 0.0
    %1744 = vmatprep.subr.mxu0 0.0
    %1745 = vmatpush2.msra.mxu0 0.0
    %1746 = vmatprep.subr.mxu0 0.0
    %1747 = vmatpush2.msra.mxu0 0.0
    %1748 = vmatprep.subr.mxu0 0.0
    %1749 = vmatpush2.msra.mxu0 0.0
    %1750 = vmatprep.subr.mxu0 0.0
    %1751 = vmatpush2.msra.mxu0 0.0
    %1752 = vmatprep.subr.mxu0 0.0
    %1753 = vmatpush2.msra.mxu0 0.0
    %1754 = vmatprep.subr.mxu0 0.0
    %1755 = vmatpush2.msra.mxu0 0.0
    %1756 = vmatprep.subr.mxu0 0.0
    %1757 = vmatpush2.msra.mxu0 0.0
    %1758 = vmatprep.subr.mxu0 0.0
    %1759 = vmatpush2.msra.mxu0 0.0
    %1760 = vmatprep.subr.mxu0 0.0
    %1761 = vmatpush2.msra.mxu0 0.0
    %1762 = vmatprep.subr.mxu0 0.0
    %1763 = vmatpush2.msra.mxu0 0.0
    %1764 = vmatprep.subr.mxu0 0.0
    %1765 = vmatpush2.msra.mxu0 0.0
    %1766 = vmatprep.subr.mxu0 0.0
    %1767 = vmatpush2.msra.mxu0 0.0
    %1768 = vmatprep.subr.mxu0 0.0
    %1769 = vmatpush2.msra.mxu0 0.0
    %1770 = vmatprep.subr.mxu0 0.0
    %1771 = vmatpush2.msra.mxu0 0.0
    %1772 = vmatprep.subr.mxu0 0.0
    %1773 = vmatpush2.msra.mxu0 0.0
    %1774 = vmatprep.mubr.f32.mxu0 0.0
    %1775 = vmatmul.mubr.f32.gmra.mxu0 %v1703
    %v1776 = vpop.f32.mrf.mxu0
    %v1777 = vadd.f32 0.0, %v1776
    %v1778 = vpop.f32.mrf.mxu0
    %v1779 = vadd.f32 0.0, %v1778
    %1780 = vdwg.mxu0
    %1781 = vmatprep.subr.mxu0 %v470
    %1782 = vmatpush1.msra.mxu0 %v469
    %1783 = vmatprep.subr.mxu0 %v466
    %1784 = vmatpush1.msra.mxu0 %v465
    %1785 = vmatprep.subr.mxu0 %v462
    %1786 = vmatpush1.msra.mxu0 %v461
    %1787 = vmatprep.subr.mxu0 %v458
    %1788 = vmatpush1.msra.mxu0 %v457
    %1789 = vmatprep.subr.mxu0 %v454
    %1790 = vmatpush1.msra.mxu0 %v453
    %1791 = vmatprep.subr.mxu0 %v450
    %1792 = vmatpush1.msra.mxu0 %v449
    %1793 = vmatprep.subr.mxu0 %v446
    %1794 = vmatpush1.msra.mxu0 %v445
    %1795 = vmatprep.subr.mxu0 %v442
    %1796 = vmatpush1.msra.mxu0 %v441
    %1797 = vmatprep.subr.mxu0 %v438
    %1798 = vmatpush1.msra.mxu0 %v437
    %1799 = vmatprep.subr.mxu0 %v434
    %1800 = vmatpush1.msra.mxu0 %v433
    %1801 = vmatprep.subr.mxu0 %v430
    %1802 = vmatpush1.msra.mxu0 %v429
    %1803 = vmatprep.subr.mxu0 %v426
    %1804 = vmatpush1.msra.mxu0 %v425
    %1805 = vmatprep.subr.mxu0 %v422
    %1806 = vmatpush1.msra.mxu0 %v421
    %1807 = vmatprep.subr.mxu0 %v418
    %1808 = vmatpush1.msra.mxu0 %v417
    %1809 = vmatprep.subr.mxu0 %v414
    %1810 = vmatpush1.msra.mxu0 %v413
    %1811 = vmatprep.subr.mxu0 %v410
    %1812 = vmatpush1.msra.mxu0 %v409
    %1813 = vmatprep.subr.mxu0 0.0
    %1814 = vmatpush2.msra.mxu0 0.0
    %1815 = vmatprep.subr.mxu0 0.0
    %1816 = vmatpush2.msra.mxu0 0.0
    %1817 = vmatprep.subr.mxu0 0.0
    %1818 = vmatpush2.msra.mxu0 0.0
    %1819 = vmatprep.subr.mxu0 0.0
    %1820 = vmatpush2.msra.mxu0 0.0
    %1821 = vmatprep.subr.mxu0 0.0
    %1822 = vmatpush2.msra.mxu0 0.0
    %1823 = vmatprep.subr.mxu0 0.0
    %1824 = vmatpush2.msra.mxu0 0.0
    %1825 = vmatprep.subr.mxu0 0.0
    %1826 = vmatpush2.msra.mxu0 0.0
    %1827 = vmatprep.subr.mxu0 0.0
    %1828 = vmatpush2.msra.mxu0 0.0
    %1829 = vmatprep.subr.mxu0 0.0
    %1830 = vmatpush2.msra.mxu0 0.0
    %1831 = vmatprep.subr.mxu0 0.0
    %1832 = vmatpush2.msra.mxu0 0.0
    %1833 = vmatprep.subr.mxu0 0.0
    %1834 = vmatpush2.msra.mxu0 0.0
    %1835 = vmatprep.subr.mxu0 0.0
    %1836 = vmatpush2.msra.mxu0 0.0
    %1837 = vmatprep.subr.mxu0 0.0
    %1838 = vmatpush2.msra.mxu0 0.0
    %1839 = vmatprep.subr.mxu0 0.0
    %1840 = vmatpush2.msra.mxu0 0.0
    %1841 = vmatprep.subr.mxu0 0.0
    %1842 = vmatpush2.msra.mxu0 0.0
    %1843 = vmatprep.subr.mxu0 0.0
    %1844 = vmatpush2.msra.mxu0 0.0
    %1845 = vmatprep.mubr.f32.mxu0 0.0
    %1846 = vmatmul.mubr.f32.gmra.mxu0 %v1703
    %v1847 = vpop.f32.mrf.mxu0
    %v1848 = vadd.f32 0.0, %v1847
    %v1849 = vpop.f32.mrf.mxu0
    %v1850 = vadd.f32 0.0, %v1849
    %1851 = vdwg.mxu0
    %v1852 = vadd.f32 %v1706, %v1777
    %v1853 = vadd.f32 %v1707, %v1779
    %v1854 = vadd.f32 %v1708, %v1848
    %v1855 = vadd.f32 %v1709, %v1850
    %v1856 = vxor.u32 %v1852, 2147483648
    %v1857 = vmul.f32 %v1856, 1.442695
    %v1858 = vpow.pop %v1857
    %v1859 = vadd.f32 %v1858, 1.0
    %v1860 = vrcp.pop %v1859
    %v1861 = vmul.f32 1.0, %v1860
    %v1862 = vxor.u32 %v1853, 2147483648
    %v1863 = vmul.f32 %v1862, 1.442695
    %v1864 = vpow.pop %v1863
    %v1865 = vadd.f32 %v1864, 1.0
    %v1866 = vrcp.pop %v1865
    %v1867 = vmul.f32 1.0, %v1866
    %v1868 = vtanh.pop %v1854
    %v1869 = vxor.u32 %v1855, 2147483648
    %v1870 = vmul.f32 %v1869, 1.442695
    %v1871 = vpow.pop %v1870
    %v1872 = vadd.f32 %v1871, 1.0
    %v1873 = vrcp.pop %v1872
    %v1874 = vmul.f32 1.0, %v1873
    %v1875 = vmul.f32 %v1867, %v1701
    %v1876 = vmul.f32 %v1861, %v1868
    %v1877 = vadd.f32 %v1875, %v1876
    %v1878 = vtanh.pop %v1877
    %v1879 = vmul.f32 %v1874, %v1878
    %v1880 = vadd.f32 %v1704, %v1879
    %1881 = vst [vmem:[#allocation3] sm:$0xff] %v1879
    %1882 = vst [vmem:[#allocation4] sm:$0xff] %v1877
    %1883 = vst [vmem:[#allocation5] sm:$0xff] %v1880
    // Predicated region
    $region46: #{tpu_custom_call.1} parent=1 // pred_check
      %p1884 = pneg %p79
    $region47: #{tpu_custom_call.1} parent=1 // pred_check_branch
      %1886 = sbr.rel (%p1884) target = $region49
    $region48: #{tpu_custom_call.1} parent=1 // pred_region
      %v1887 = vld [vmem:[#allocation12] sm:$0xff]
      %v1888 = vld [vmem:[#allocation12 + $0x8] sm:$0xff]
      %v1889 = vld [vmem:[#allocation12 + $0x10] sm:$0xff]
      %v1890 = vld [vmem:[#allocation12 + $0x18] sm:$0xff]
      %v1891 = vld [vmem:[#allocation12 + $0x20] sm:$0xff]
      %v1892 = vld [vmem:[#allocation12 + $0x28] sm:$0xff]
      %v1893 = vld [vmem:[#allocation12 + $0x30] sm:$0xff]
      %v1894 = vld [vmem:[#allocation12 + $0x38] sm:$0xff]
      %v1895 = vld [vmem:[#allocation12 + $0x40] sm:$0xff]
      %v1896 = vld [vmem:[#allocation12 + $0x48] sm:$0xff]
      %v1897 = vld [vmem:[#allocation12 + $0x50] sm:$0xff]
      %v1898 = vld [vmem:[#allocation12 + $0x58] sm:$0xff]
      %v1899 = vld [vmem:[#allocation12 + $0x60] sm:$0xff]
      %v1900 = vld [vmem:[#allocation12 + $0x68] sm:$0xff]
      %v1901 = vld [vmem:[#allocation12 + $0x70] sm:$0xff]
      %v1902 = vld [vmem:[#allocation12 + $0x78] sm:$0xff]
      %v1903 = vld [vmem:[%s5] sm:$0x1]
      %v1905 = vlaneseq
      %v1906 = vshrl.u32 %v1905, 7
      %v1907 = vsub.s32 0, %v1906
      %v1908 = vrot.slane %v1903, %v1907
      %1910 = vmatprep.subr.mxu0 0.0
      %1911 = vmatpush1.msra.mxu0 %v1902
      %1912 = vmatprep.subr.mxu0 0.0
      %1913 = vmatpush1.msra.mxu0 %v1901
      %1914 = vmatprep.subr.mxu0 0.0
      %1915 = vmatpush1.msra.mxu0 %v1900
      %1916 = vmatprep.subr.mxu0 0.0
      %1917 = vmatpush1.msra.mxu0 %v1899
      %1918 = vmatprep.subr.mxu0 0.0
      %1919 = vmatpush1.msra.mxu0 %v1898
      %1920 = vmatprep.subr.mxu0 0.0
      %1921 = vmatpush1.msra.mxu0 %v1897
      %1922 = vmatprep.subr.mxu0 0.0
      %1923 = vmatpush1.msra.mxu0 %v1896
      %1924 = vmatprep.subr.mxu0 0.0
      %1925 = vmatpush1.msra.mxu0 %v1895
      %1926 = vmatprep.subr.mxu0 0.0
      %1927 = vmatpush1.msra.mxu0 %v1894
      %1928 = vmatprep.subr.mxu0 0.0
      %1929 = vmatpush1.msra.mxu0 %v1893
      %1930 = vmatprep.subr.mxu0 0.0
      %1931 = vmatpush1.msra.mxu0 %v1892
      %1932 = vmatprep.subr.mxu0 0.0
      %1933 = vmatpush1.msra.mxu0 %v1891
      %1934 = vmatprep.subr.mxu0 0.0
      %1935 = vmatpush1.msra.mxu0 %v1890
      %1936 = vmatprep.subr.mxu0 0.0
      %1937 = vmatpush1.msra.mxu0 %v1889
      %1938 = vmatprep.subr.mxu0 0.0
      %1939 = vmatpush1.msra.mxu0 %v1888
      %1940 = vmatprep.subr.mxu0 0.0
      %1941 = vmatpush1.msra.mxu0 %v1887
      %1942 = vmatprep.subr.mxu0 0.0
      %1943 = vmatpush2.msra.mxu0 0.0
      %1944 = vmatprep.subr.mxu0 0.0
      %1945 = vmatpush2.msra.mxu0 0.0
      %1946 = vmatprep.subr.mxu0 0.0
      %1947 = vmatpush2.msra.mxu0 0.0
      %1948 = vmatprep.subr.mxu0 0.0
      %1949 = vmatpush2.msra.mxu0 0.0
      %1950 = vmatprep.subr.mxu0 0.0
      %1951 = vmatpush2.msra.mxu0 0.0
      %1952 = vmatprep.subr.mxu0 0.0
      %1953 = vmatpush2.msra.mxu0 0.0
      %1954 = vmatprep.subr.mxu0 0.0
      %1955 = vmatpush2.msra.mxu0 0.0
      %1956 = vmatprep.subr.mxu0 0.0
      %1957 = vmatpush2.msra.mxu0 0.0
      %1958 = vmatprep.subr.mxu0 0.0
      %1959 = vmatpush2.msra.mxu0 0.0
      %1960 = vmatprep.subr.mxu0 0.0
      %1961 = vmatpush2.msra.mxu0 0.0
      %1962 = vmatprep.subr.mxu0 0.0
      %1963 = vmatpush2.msra.mxu0 0.0
      %1964 = vmatprep.subr.mxu0 0.0
      %1965 = vmatpush2.msra.mxu0 0.0
      %1966 = vmatprep.subr.mxu0 0.0
      %1967 = vmatpush2.msra.mxu0 0.0
      %1968 = vmatprep.subr.mxu0 0.0
      %1969 = vmatpush2.msra.mxu0 0.0
      %1970 = vmatprep.subr.mxu0 0.0
      %1971 = vmatpush2.msra.mxu0 0.0
      %1972 = vmatprep.subr.mxu0 0.0
      %1973 = vmatpush2.msra.mxu0 0.0
      %1974 = vmatprep.mubr.f32.mxu0 0.0
      %1975 = vmatmul.mubr.f32.gmra.mxu0 %v1880
      %v1976 = vpop.f32.mrf.mxu0
      %v1977 = vadd.f32 %v1908, %v1976
      %v1978 = vpop.f32.mrf.mxu0
      %1979 = vdwg.mxu0
      %v1980 = vxor.u32 %v1977, 2147483648
      %v1981 = vmul.f32 %v1980, 1.442695
      %v1982 = vpow.pop %v1981
      %v1983 = vadd.f32 %v1982, 1.0
      %v1984 = vrcp.pop %v1983
      %v1985 = vmul.f32 1.0, %v1984
      %1986 = vst [vmem:[#allocation14] sm:$0xff] %v1985
    $region49: #{tpu_custom_call.1} parent=1 // pred_fallthru
      _
    // Predicated region
    $region50: #{tpu_custom_call.1} parent=1 // pred_check
      _
    $region51: #{tpu_custom_call.1} parent=1 // pred_check_branch
      %1988 = sbr.rel (0) target = $region53
    $region52: #{tpu_custom_call.1} parent=1 // pred_region
      %s1990 = ssub.s32 128, 128
      %1991 = vsyncadd [#allocation8], %s1990
      %s1993 = sshll.u32 [#allocation14], 4
      %s1994 = int_to_ptr.vmem [resolvable:$true] %s1993
      %1996 = dma.vmem_to_hbm [thread:$0]  %s1994, 128, %s6, [#allocation8]
    $region53: #{tpu_custom_call.1} parent=1 // pred_fallthru
      _
    // Predicated region
    $region54: #{tpu_custom_call.1} parent=1 // pred_check
      _
    $region55: #{tpu_custom_call.1} parent=1 // pred_check_branch
      %1998 = sbr.rel (0) target = $region57
    $region56: #{tpu_custom_call.1} parent=1 // pred_region
      %1999 = dma.done [#allocation8], 128
    $region57: #{tpu_custom_call.1} parent=1 // pred_fallthru
      _
    %2000 = vsyncpa [#allocation7], 1
    %2001 = vsyncpa [#allocation10], 1
    %2002 = vsyncpa [#allocation13], 1
    %2003 = vsyncpa [#allocation8], 1

</llo_original>
